<compile_context>
chip_gen: v6e
topology: v6e:2x2x1
jax: 0.10.0
libtpu: 0.0.40
codegen_flags: <defaults>
</compile_context>

<pallas_src>
import jax
import jax.numpy as jnp
from jax.experimental import pallas as pl
from jax.experimental.pallas import tpu as pltpu


_MAX_TIME_CHUNK = 32   # review suggests 16-64; also see the padding fallback below


def _choose_time_chunk(t2, max_chunk=_MAX_TIME_CHUNK):
    """Pick (t_chunk, padded_t2).  Prefer an exact divisor of t2; for awkward
    lengths pad t2 to a multiple of max_chunk and mask the tail in-kernel."""
    if t2 <= max_chunk:
        return t2, t2
    best = 1
    for cand in range(max_chunk, 0, -1):
        if t2 % cand == 0:
            best = cand
            break
    if best >= max_chunk // 2:
        return best, t2
    t2p = ((t2 + max_chunk - 1) // max_chunk) * max_chunk
    return max_chunk, t2p


def _round_up(x, m):
    return ((x + m - 1) // m) * m


def pblstm_layer_forward(input_x, params):
    """Pallas TPU implementation of pBLSTMLayer.forward.

    input_x: (B, T, F) float32, batch_first (same as the PyTorch module).
    params : dict with w_ih_f, w_hh_f, b_ih_f, b_hh_f (forward direction)
             and w_ih_b, w_hh_b, b_ih_b, b_hh_b (backward direction), with
             torch.nn.LSTM shapes: w_ih (4H, 2F), w_hh (4H, H), b (4H,).
    Returns (output (B, T//2, 2H), (h_n (2, B, H), c_n (2, B, H))).
    """
    batch, t, feat = input_x.shape
    if t % 2 != 0:
        input_x = input_x[:, :-1, :]
        t -= 1
    t2 = t // 2
    if t2 == 0:
        raise ValueError("pBLSTMLayer needs at least 2 timesteps")
    in2 = 2 * feat
    hidden = params["w_hh_f"].shape[1]
    g4 = 4 * hidden

    t_chunk, t2p = _choose_time_chunk(t2)
    n_chunks = t2p // t_chunk
    has_time_pad = t2p != t2

    # Pad batch to a sublane multiple (8) so in-kernel reshapes are pure tile
    # relabels and all loads/stores stay (8,128) aligned.
    bp = max(_round_up(batch, 8), 8)
    has_batch_pad = bp != batch

    # (B, T, F) -> (B, T2, 2F) -> time-major (T2, B, 2F).  This one small
    # transpose of x replaces the old HBM materialization of the full
    # (2, T2, B, 4H) f32 gate tensor (the input projection is fused below).
    x_tm = jnp.swapaxes(input_x.reshape(batch, t2, in2), 0, 1)
    if has_time_pad or has_batch_pad:
        x_tm = jnp.pad(x_tm, ((0, t2p - t2), (0, bp - batch), (0, 0)))

    # Weights transposed for row-major matmuls and cast to bf16 (native MXU
    # path on v6e/v7x, halved VMEM residency); accumulation stays f32.
    w_ih = jnp.stack([params["w_ih_f"].T, params["w_ih_b"].T]).astype(jnp.bfloat16)  # (2, 2F, 4H)
    w_hh = jnp.stack([params["w_hh_f"].T, params["w_hh_b"].T]).astype(jnp.bfloat16)  # (2, H, 4H)
    bias = jnp.stack([params["b_ih_f"] + params["b_hh_f"],
                      params["b_ih_b"] + params["b_hh_b"]]
                     ).reshape(2, 1, g4).astype(jnp.float32)                          # (2, 1, 4H)

    def time_block(d, c):
        # forward (d=0) visits time chunks 0..n-1, backward (d=1) visits n-1..0
        return c + d * (n_chunks - 1 - 2 * c)

    def kernel(x_ref, wih_ref, whh_ref, b_ref, out_ref, hn_ref, cn_ref,
               gates_scr, h_scr, c_scr):
        d = pl.program_id(0)          # direction: 0 = forward, 1 = backward
        c = pl.program_id(1)          # time-chunk index (sequential, carries state)

        @pl.when(c == 0)              # fresh state at the start of each direction
        def _():
            h_scr[...] = jnp.zeros_like(h_scr)
            c_scr[...] = jnp.zeros_like(c_scr)

        # ---- chunk prologue: fused input projection on the MXU --------------
        # (t_chunk, Bp, 2F) -> (t_chunk*Bp, 2F) @ (2F, 4H) -> (t_chunk, Bp, 4H)
        acts = x_ref[...].reshape(t_chunk * bp, in2).astype(jnp.bfloat16)
        gates_in = jnp.dot(acts, wih_ref[...], preferred_element_type=jnp.float32)
        gates_scr[...] = gates_in.reshape(t_chunk, bp, g4) + b_ref[...]

        whh = whh_ref[...]            # (H, 4H) bf16, resident for the whole chunk

        def run_chunk(reverse, orig_chunk):
            h_prev = h_scr[...]
            c_prev = c_scr[...]
            # Static Python unroll -> static Ref indices on the serial path.
            # NOTE: sweep _MAX_TIME_CHUNK / partial unroll if vreg spills show
            # up in bundle dumps at large B*H.
            for j in range(t_chunk):
                t_idx = (t_chunk - 1 - j) if reverse else j
                g = gates_scr[t_idx] + jnp.dot(
                    h_prev.astype(jnp.bfloat16), whh,
                    preferred_element_type=jnp.float32)               # (Bp, 4H)
                # PyTorch gate order: i, f, g, o.
                i_g = jax.nn.sigmoid(g[:, 0 * hidden:1 * hidden])
                f_g = jax.nn.sigmoid(g[:, 1 * hidden:2 * hidden])
                g_g = jnp.tanh(g[:, 2 * hidden:3 * hidden])
                o_g = jax.nn.sigmoid(g[:, 3 * hidden:4 * hidden])
                c_new = f_g * c_prev + i_g * g_g
                h_new = o_g * jnp.tanh(c_new)
                if has_time_pad:
                    # Freeze the state on padded timesteps so h_n/c_n and the
                    # backward pass stay exact.
                    valid = (orig_chunk * t_chunk + t_idx) < t2
                    h_new = jnp.where(valid, h_new, h_prev)
                    c_new = jnp.where(valid, c_new, c_prev)
                out_ref[t_idx] = h_new.astype(out_ref.dtype)
                h_prev, c_prev = h_new, c_new
            h_scr[...] = h_prev
            c_scr[...] = c_prev

        @pl.when(d == 0)
        def _():
            run_chunk(False, c)

        @pl.when(d == 1)
        def _():
            run_chunk(True, n_chunks - 1 - c)

        # Running final state written every chunk: cheap (Bp,H) VMEM writes,
        # robust against output writeback timing for revisited blocks.
        hn_ref[...] = h_scr[...].astype(hn_ref.dtype)
        cn_ref[...] = c_scr[...].astype(cn_ref.dtype)

    # ---- explicit VMEM budget (default scoped limit is only 16/32 MiB) ------
    vmem_bytes = (
        2 * t_chunk * bp * in2 * 4        # x chunk, double buffered
        + 2 * in2 * g4 * 2                # W_ih (bf16)
        + 2 * hidden * g4 * 2             # W_hh (bf16)
        + 2 * g4 * 4                      # bias
        + 2 * t_chunk * bp * hidden * 4   # out chunk, double buffered
        + 4 * bp * hidden * 4             # h_n / c_n blocks
        + t_chunk * bp * g4 * 4           # gates scratch
        + 2 * bp * hidden * 4             # h / c carry scratch
    )
    vmem_limit = int(min(2 * vmem_bytes + (2 << 20), 100 * 1024 * 1024))

    grid_spec = pltpu.PrefetchScalarGridSpec(
        num_scalar_prefetch=0,
        grid=(2, n_chunks),
        in_specs=[
            pl.BlockSpec((t_chunk, bp, in2),
                         lambda d, c: (time_block(d, c), 0, 0)),
            pl.BlockSpec((None, in2, g4), lambda d, c: (d, 0, 0)),      # W_ih
            pl.BlockSpec((None, hidden, g4), lambda d, c: (d, 0, 0)),   # W_hh
            pl.BlockSpec((None, 1, g4), lambda d, c: (d, 0, 0)),        # bias
        ],
        out_specs=[
            pl.BlockSpec((None, t_chunk, bp, hidden),
                         lambda d, c: (d, time_block(d, c), 0, 0)),
            pl.BlockSpec((None, bp, hidden), lambda d, c: (d, 0, 0)),   # h_n
            pl.BlockSpec((None, bp, hidden), lambda d, c: (d, 0, 0)),   # c_n
        ],
        scratch_shapes=[
            pltpu.VMEM((t_chunk, bp, g4), jnp.float32),   # fused gates chunk
            pltpu.VMEM((bp, hidden), jnp.float32),        # h carry across chunks
            pltpu.VMEM((bp, hidden), jnp.float32),        # c carry across chunks
        ],
    )

    out_tm, h_n, c_n = pl.pallas_call(
        kernel,
        out_shape=(
            jax.ShapeDtypeStruct((2, t2p, bp, hidden), jnp.float32),
            jax.ShapeDtypeStruct((2, bp, hidden), jnp.float32),
            jax.ShapeDtypeStruct((2, bp, hidden), jnp.float32),
        ),
        grid_spec=grid_spec,
        compiler_params=pltpu.CompilerParams(
            # direction axis: independent (maps onto the 2 TensorCores on v7x);
            # time-chunk axis: sequential, carries the recurrent state.
            dimension_semantics=("parallel", "arbitrary"),
            vmem_limit_bytes=vmem_limit,
        ),
    )(x_tm, w_ih, w_hh, bias)

    # (2, T2p, Bp, H) -> (B, T2, 2H); lanes [0:H]=forward, [H:2H]=backward,
    # matching torch.nn.LSTM(bidirectional=True). Single fused transpose+reshape.
    # TODO(synk): when H % 128 == 0 the kernel could store straight into a lane-
    # blocked (B, T2, 2H) layout and skip this transpose pass entirely.
    output = jnp.transpose(out_tm, (2, 1, 0, 3)).reshape(bp, t2p, 2 * hidden)
    if has_batch_pad or has_time_pad:
        output = output[:batch, :t2]
    if has_batch_pad:
        h_n = h_n[:, :batch]
        c_n = c_n[:, :batch]
    return output, (h_n, c_n)


def init_params(key, input_feature_dim, hidden_dim):
    """Deterministic PyTorch-like uniform(-1/sqrt(H), 1/sqrt(H)) initialization."""
    h = hidden_dim
    in_dim = input_feature_dim * 2
    bound = 1.0 / jnp.sqrt(jnp.asarray(h, jnp.float32))
    keys = jax.random.split(key, 8)
    u = lambda k, shape: jax.random.uniform(k, shape, jnp.float32, -bound, bound)
    return {
        "w_ih_f": u(keys[0], (4 * h, in_dim)),
        "w_hh_f": u(keys[1], (4 * h, h)),
        "b_ih_f": u(keys[2], (4 * h,)),
        "b_hh_f": u(keys[3], (4 * h,)),
        "w_ih_b": u(keys[4], (4 * h, in_dim)),
        "w_hh_b": u(keys[5], (4 * h, h)),
        "b_ih_b": u(keys[6], (4 * h,)),
        "b_hh_b": u(keys[7], (4 * h,)),
    }


def _reference_pblstm(input_x, params):
    """Pure-JAX (lax.scan) reference mirroring torch.nn.LSTM bidirectional."""
    batch, t, feat = input_x.shape
    if t % 2 != 0:
        input_x = input_x[:, :-1, :]
        t -= 1
    t2 = t // 2
    xp = input_x.reshape(batch, t2, 2 * feat)
    xs = jnp.swapaxes(xp, 0, 1)                                  # (T2, B, 2F)

    def run_dir(w_ih, w_hh, b_ih, b_hh, reverse):
        hd = w_hh.shape[1]

        def step(carry, x_t):
            h, c = carry
            g = x_t @ w_ih.T + h @ w_hh.T + b_ih + b_hh
            i = jax.nn.sigmoid(g[:, :hd])
            f = jax.nn.sigmoid(g[:, hd:2 * hd])
            gg = jnp.tanh(g[:, 2 * hd:3 * hd])
            o = jax.nn.sigmoid(g[:, 3 * hd:])
            c = f * c + i * gg
            h = o * jnp.tanh(c)
            return (h, c), h

        init = (jnp.zeros((batch, hd), jnp.float32),
                jnp.zeros((batch, hd), jnp.float32))
        (h_n, c_n), hs = jax.lax.scan(step, init, xs, reverse=reverse)
        return jnp.swapaxes(hs, 0, 1), h_n, c_n

    of, hf, cf = run_dir(params["w_ih_f"], params["w_hh_f"],
                         params["b_ih_f"], params["b_hh_f"], reverse=False)
    ob, hb, cb = run_dir(params["w_ih_b"], params["w_hh_b"],
                         params["b_ih_b"], params["b_hh_b"], reverse=True)
    output = jnp.concatenate([of, ob], axis=-1)
    return output, (jnp.stack([hf, hb]), jnp.stack([cf, cb]))


if __name__ == "__main__":
    B, T, F, H = 2, 8, 16, 32
    key = jax.random.PRNGKey(0)
    k_x, k_p = jax.random.split(key)
    x = jax.random.normal(k_x, (B, T, F), dtype=jnp.float32)
    params = init_params(k_p, input_feature_dim=F, hidden_dim=H)

    fwd = jax.jit(pblstm_layer_forward)
    output, (h_n, c_n) = fwd(x, params)
    jax.block_until_ready((output, h_n, c_n))

    assert output.shape == (B, T // 2, 2 * H)
    assert h_n.shape == (2, B, H)
    assert c_n.shape == (2, B, H)

    # numerical sanity check vs. a pure-JAX lax.scan reference (bf16 weights in
    # the kernel -> slightly looser tolerances than pure f32).
    ref_out, (ref_h, ref_c) = jax.jit(_reference_pblstm)(x, params)
    assert bool(jnp.allclose(output, ref_out, atol=2e-2, rtol=2e-2)), (
        "output mismatch, max abs err "
        + str(float(jnp.max(jnp.abs(output - ref_out)))))
    assert bool(jnp.allclose(h_n, ref_h, atol=2e-2, rtol=2e-2))
    assert bool(jnp.allclose(c_n, ref_c, atol=2e-2, rtol=2e-2))

    print("KERNEL_OK")
</pallas_src>

<mosaic_0001>
module attributes {stable_mosaic.version = 11 : i64} {
  func.func @kernel(%arg0: i32, %arg1: i32, %arg2: memref<4x8x32xf32, #tpu.memory_space<vmem>>, %arg3: memref<1x32x128xbf16, #tpu.memory_space<vmem>>, %arg4: memref<1x32x128xbf16, #tpu.memory_space<vmem>>, %arg5: memref<1x1x128xf32, #tpu.memory_space<vmem>>, %arg6: memref<1x4x8x32xf32, #tpu.memory_space<vmem>>, %arg7: memref<1x8x32xf32, #tpu.memory_space<vmem>>, %arg8: memref<1x8x32xf32, #tpu.memory_space<vmem>>, %arg9: memref<4x8x128xf32, #tpu.memory_space<vmem>>, %arg10: memref<8x32xf32, #tpu.memory_space<vmem>>, %arg11: memref<8x32xf32, #tpu.memory_space<vmem>>) attributes {dimension_semantics = [#tpu.dimension_semantics<parallel>, #tpu.dimension_semantics<arbitrary>], iteration_bounds = array<i64: 2, 1>, scalar_prefetch = 0 : i64, scratch_operands = 3 : i64, tpu.core_type = #tpu.core_type<tc>, window_params = [{transform_indices = @transform_0, window_bounds = array<i64: 4, 8, 32>}, {transform_indices = @transform_1, window_bounds = array<i64: 1, 32, 128>}, {transform_indices = @transform_2, window_bounds = array<i64: 1, 32, 128>}, {transform_indices = @transform_3, window_bounds = array<i64: 1, 1, 128>}, {transform_indices = @transform_4, window_bounds = array<i64: 1, 4, 8, 32>}, {transform_indices = @transform_5, window_bounds = array<i64: 1, 8, 32>}, {transform_indices = @transform_6, window_bounds = array<i64: 1, 8, 32>}]} {
    %c0_i32 = arith.constant 0 : i32
    %0 = arith.cmpi eq, %arg1, %c0_i32 : i32
    %1 = arith.extui %0 : i1 to i32
    %c0_i32_0 = arith.constant 0 : i32
    %2 = arith.cmpi ne, %1, %c0_i32_0 : i32
    scf.if %2 {
      %cst_28 = arith.constant 0.000000e+00 : f32
      %32 = vector.broadcast %cst_28 : f32 to vector<8x32xf32>
      %c0_29 = arith.constant 0 : index
      %c0_30 = arith.constant 0 : index
      %33 = vector.load %arg10[%c0_29, %c0_30] : memref<8x32xf32, #tpu.memory_space<vmem>>, vector<8x32xf32>
      tpu.vector_store %arg10[%c0_29, %c0_30], %32 {strides = array<i32>} : memref<8x32xf32, #tpu.memory_space<vmem>>, vector<8x32xf32>,
      %cst_31 = arith.constant 0.000000e+00 : f32
      %34 = vector.broadcast %cst_31 : f32 to vector<8x32xf32>
      %c0_32 = arith.constant 0 : index
      %c0_33 = arith.constant 0 : index
      %35 = vector.load %arg11[%c0_32, %c0_33] : memref<8x32xf32, #tpu.memory_space<vmem>>, vector<8x32xf32>
      tpu.vector_store %arg11[%c0_32, %c0_33], %34 {strides = array<i32>} : memref<8x32xf32, #tpu.memory_space<vmem>>, vector<8x32xf32>,
    } else {
    }
    %c0 = arith.constant 0 : index
    %c0_1 = arith.constant 0 : index
    %c0_2 = arith.constant 0 : index
    %3 = vector.load %arg2[%c0, %c0_1, %c0_2] : memref<4x8x32xf32, #tpu.memory_space<vmem>>, vector<4x8x32xf32>
    %4 = vector.shape_cast %3 : vector<4x8x32xf32> to vector<32x32xf32>
    %5 = arith.truncf %4 : vector<32x32xf32> to vector<32x32xbf16>
    %c0_3 = arith.constant 0 : index
    %c0_4 = arith.constant 0 : index
    %c0_5 = arith.constant 0 : index
    %6 = vector.load %arg3[%c0_3, %c0_4, %c0_5] : memref<1x32x128xbf16, #tpu.memory_space<vmem>>, vector<1x32x128xbf16>
    %7 = vector.shape_cast %6 : vector<1x32x128xbf16> to vector<32x128xbf16>
    %cst = arith.constant dense<0.000000e+00> : vector<32x128xf32>
    %8 = tpu.matmul %5, %7, %cst {dimension_numbers = #tpu.dot_dimension_numbers<[1], [0], [0], [1], [0, 0, 1, 1], [], []>} : vector<32x32xbf16>, vector<32x128xbf16>, vector<32x128xf32> -> vector<32x128xf32>
    %9 = vector.shape_cast %8 : vector<32x128xf32> to vector<4x8x128xf32>
    %c0_6 = arith.constant 0 : index
    %c0_7 = arith.constant 0 : index
    %c0_8 = arith.constant 0 : index
    %10 = vector.load %arg5[%c0_6, %c0_7, %c0_8] : memref<1x1x128xf32, #tpu.memory_space<vmem>>, vector<1x1x128xf32>
    %11 = vector.shape_cast %10 : vector<1x1x128xf32> to vector<1x128xf32>
    %12 = vector.shape_cast %11 : vector<1x128xf32> to vector<1x1x128xf32>
    %13 = vector.broadcast %12 : vector<1x1x128xf32> to vector<4x8x128xf32>
    %14 = arith.addf %9, %13 : vector<4x8x128xf32>
    %c0_9 = arith.constant 0 : index
    %c0_10 = arith.constant 0 : index
    %c0_11 = arith.constant 0 : index
    %15 = vector.load %arg9[%c0_9, %c0_10, %c0_11] : memref<4x8x128xf32, #tpu.memory_space<vmem>>, vector<4x8x128xf32>
    tpu.vector_store %arg9[%c0_9, %c0_10, %c0_11], %14 {strides = array<i32>} : memref<4x8x128xf32, #tpu.memory_space<vmem>>, vector<4x8x128xf32>,
    %c0_12 = arith.constant 0 : index
    %c0_13 = arith.constant 0 : index
    %c0_14 = arith.constant 0 : index
    %16 = vector.load %arg4[%c0_12, %c0_13, %c0_14] : memref<1x32x128xbf16, #tpu.memory_space<vmem>>, vector<1x32x128xbf16>
    %17 = vector.shape_cast %16 : vector<1x32x128xbf16> to vector<32x128xbf16>
    %c0_i32_15 = arith.constant 0 : i32
    %18 = arith.cmpi eq, %arg0, %c0_i32_15 : i32
    %19 = arith.extui %18 : i1 to i32
    %c0_i32_16 = arith.constant 0 : i32
    %20 = arith.cmpi ne, %19, %c0_i32_16 : i32
    scf.if %20 {
      %c0_28 = arith.constant 0 : index
      %c0_29 = arith.constant 0 : index
      %32 = vector.load %arg10[%c0_28, %c0_29] : memref<8x32xf32, #tpu.memory_space<vmem>>, vector<8x32xf32>
      %c0_30 = arith.constant 0 : index
      %c0_31 = arith.constant 0 : index
      %33 = vector.load %arg11[%c0_30, %c0_31] : memref<8x32xf32, #tpu.memory_space<vmem>>, vector<8x32xf32>
      %c0_32 = arith.constant 0 : index
      %c0_33 = arith.constant 0 : index
      %c0_34 = arith.constant 0 : index
      %34 = vector.load %arg9[%c0_32, %c0_33, %c0_34] : memref<4x8x128xf32, #tpu.memory_space<vmem>>, vector<1x8x128xf32>
      %35 = vector.shape_cast %34 : vector<1x8x128xf32> to vector<8x128xf32>
      %36 = arith.truncf %32 : vector<8x32xf32> to vector<8x32xbf16>
      %cst_35 = arith.constant dense<0.000000e+00> : vector<8x128xf32>
      %37 = tpu.matmul %36, %17, %cst_35 {dimension_numbers = #tpu.dot_dimension_numbers<[1], [0], [0], [1], [0, 0, 1, 1], [], []>} : vector<8x32xbf16>, vector<32x128xbf16>, vector<8x128xf32> -> vector<8x128xf32>
      %38 = arith.addf %35, %37 : vector<8x128xf32>
      %39 = vector.extract_strided_slice %38 {offsets = [0, 0], sizes = [8, 32], strides = [1, 1]} : vector<8x128xf32> to vector<8x32xf32>
      %40 = arith.negf %39 : vector<8x32xf32>
      %41 = math.exp %40 : vector<8x32xf32>
      %cst_36 = arith.constant 1.000000e+00 : f32
      %42 = vector.broadcast %cst_36 : f32 to vector<8x32xf32>
      %43 = arith.addf %42, %41 : vector<8x32xf32>
      %44 = arith.divf %42, %43 : vector<8x32xf32>
      %45 = vector.extract_strided_slice %38 {offsets = [0, 32], sizes = [8, 32], strides = [1, 1]} : vector<8x128xf32> to vector<8x32xf32>
      %46 = arith.negf %45 : vector<8x32xf32>
      %47 = math.exp %46 : vector<8x32xf32>
      %cst_37 = arith.constant 1.000000e+00 : f32
      %48 = vector.broadcast %cst_37 : f32 to vector<8x32xf32>
      %49 = arith.addf %48, %47 : vector<8x32xf32>
      %50 = arith.divf %48, %49 : vector<8x32xf32>
      %51 = vector.extract_strided_slice %38 {offsets = [0, 64], sizes = [8, 32], strides = [1, 1]} : vector<8x128xf32> to vector<8x32xf32>
      %52 = math.tanh %51 : vector<8x32xf32>
      %53 = vector.extract_strided_slice %38 {offsets = [0, 96], sizes = [8, 32], strides = [1, 1]} : vector<8x128xf32> to vector<8x32xf32>
      %54 = arith.negf %53 : vector<8x32xf32>
      %55 = math.exp %54 : vector<8x32xf32>
      %cst_38 = arith.constant 1.000000e+00 : f32
      %56 = vector.broadcast %cst_38 : f32 to vector<8x32xf32>
      %57 = arith.addf %56, %55 : vector<8x32xf32>
      %58 = arith.divf %56, %57 : vector<8x32xf32>
      %59 = arith.mulf %50, %33 : vector<8x32xf32>
      %60 = arith.mulf %44, %52 : vector<8x32xf32>
      %61 = arith.addf %59, %60 : vector<8x32xf32>
      %62 = math.tanh %61 : vector<8x32xf32>
      %63 = arith.mulf %58, %62 : vector<8x32xf32>
      %c0_39 = arith.constant 0 : index
      %c0_40 = arith.constant 0 : index
      %c0_41 = arith.constant 0 : index
      %c0_42 = arith.constant 0 : index
      %64 = vector.load %arg6[%c0_39, %c0_40, %c0_41, %c0_42] : memref<1x4x8x32xf32, #tpu.memory_space<vmem>>, vector<1x1x8x32xf32>
      %65 = vector.shape_cast %64 : vector<1x1x8x32xf32> to vector<8x32xf32>
      %66 = vector.shape_cast %63 : vector<8x32xf32> to vector<1x1x8x32xf32>
      tpu.vector_store %arg6[%c0_39, %c0_40, %c0_41, %c0_42], %66 {strides = array<i32>} : memref<1x4x8x32xf32, #tpu.memory_space<vmem>>, vector<1x1x8x32xf32>,
      %c1 = arith.constant 1 : index
      %c0_43 = arith.constant 0 : index
      %c0_44 = arith.constant 0 : index
      %67 = vector.load %arg9[%c1, %c0_43, %c0_44] : memref<4x8x128xf32, #tpu.memory_space<vmem>>, vector<1x8x128xf32>
      %68 = vector.shape_cast %67 : vector<1x8x128xf32> to vector<8x128xf32>
      %69 = arith.truncf %63 : vector<8x32xf32> to vector<8x32xbf16>
      %cst_45 = arith.constant dense<0.000000e+00> : vector<8x128xf32>
      %70 = tpu.matmul %69, %17, %cst_45 {dimension_numbers = #tpu.dot_dimension_numbers<[1], [0], [0], [1], [0, 0, 1, 1], [], []>} : vector<8x32xbf16>, vector<32x128xbf16>, vector<8x128xf32> -> vector<8x128xf32>
      %71 = arith.addf %68, %70 : vector<8x128xf32>
      %72 = vector.extract_strided_slice %71 {offsets = [0, 0], sizes = [8, 32], strides = [1, 1]} : vector<8x128xf32> to vector<8x32xf32>
      %73 = arith.negf %72 : vector<8x32xf32>
      %74 = math.exp %73 : vector<8x32xf32>
      %cst_46 = arith.constant 1.000000e+00 : f32
      %75 = vector.broadcast %cst_46 : f32 to vector<8x32xf32>
      %76 = arith.addf %75, %74 : vector<8x32xf32>
      %77 = arith.divf %75, %76 : vector<8x32xf32>
      %78 = vector.extract_strided_slice %71 {offsets = [0, 32], sizes = [8, 32], strides = [1, 1]} : vector<8x128xf32> to vector<8x32xf32>
      %79 = arith.negf %78 : vector<8x32xf32>
      %80 = math.exp %79 : vector<8x32xf32>
      %cst_47 = arith.constant 1.000000e+00 : f32
      %81 = vector.broadcast %cst_47 : f32 to vector<8x32xf32>
      %82 = arith.addf %81, %80 : vector<8x32xf32>
      %83 = arith.divf %81, %82 : vector<8x32xf32>
      %84 = vector.extract_strided_slice %71 {offsets = [0, 64], sizes = [8, 32], strides = [1, 1]} : vector<8x128xf32> to vector<8x32xf32>
      %85 = math.tanh %84 : vector<8x32xf32>
      %86 = vector.extract_strided_slice %71 {offsets = [0, 96], sizes = [8, 32], strides = [1, 1]} : vector<8x128xf32> to vector<8x32xf32>
      %87 = arith.negf %86 : vector<8x32xf32>
      %88 = math.exp %87 : vector<8x32xf32>
      %cst_48 = arith.constant 1.000000e+00 : f32
      %89 = vector.broadcast %cst_48 : f32 to vector<8x32xf32>
      %90 = arith.addf %89, %88 : vector<8x32xf32>
      %91 = arith.divf %89, %90 : vector<8x32xf32>
      %92 = arith.mulf %83, %61 : vector<8x32xf32>
      %93 = arith.mulf %77, %85 : vector<8x32xf32>
      %94 = arith.addf %92, %93 : vector<8x32xf32>
      %95 = math.tanh %94 : vector<8x32xf32>
      %96 = arith.mulf %91, %95 : vector<8x32xf32>
      %c0_49 = arith.constant 0 : index
      %c1_50 = arith.constant 1 : index
      %c0_51 = arith.constant 0 : index
      %c0_52 = arith.constant 0 : index
      %97 = vector.load %arg6[%c0_49, %c1_50, %c0_51, %c0_52] : memref<1x4x8x32xf32, #tpu.memory_space<vmem>>, vector<1x1x8x32xf32>
      %98 = vector.shape_cast %97 : vector<1x1x8x32xf32> to vector<8x32xf32>
      %99 = vector.shape_cast %96 : vector<8x32xf32> to vector<1x1x8x32xf32>
      tpu.vector_store %arg6[%c0_49, %c1_50, %c0_51, %c0_52], %99 {strides = array<i32>} : memref<1x4x8x32xf32, #tpu.memory_space<vmem>>, vector<1x1x8x32xf32>,
      %c2 = arith.constant 2 : index
      %c0_53 = arith.constant 0 : index
      %c0_54 = arith.constant 0 : index
      %100 = vector.load %arg9[%c2, %c0_53, %c0_54] : memref<4x8x128xf32, #tpu.memory_space<vmem>>, vector<1x8x128xf32>
      %101 = vector.shape_cast %100 : vector<1x8x128xf32> to vector<8x128xf32>
      %102 = arith.truncf %96 : vector<8x32xf32> to vector<8x32xbf16>
      %cst_55 = arith.constant dense<0.000000e+00> : vector<8x128xf32>
      %103 = tpu.matmul %102, %17, %cst_55 {dimension_numbers = #tpu.dot_dimension_numbers<[1], [0], [0], [1], [0, 0, 1, 1], [], []>} : vector<8x32xbf16>, vector<32x128xbf16>, vector<8x128xf32> -> vector<8x128xf32>
      %104 = arith.addf %101, %103 : vector<8x128xf32>
      %105 = vector.extract_strided_slice %104 {offsets = [0, 0], sizes = [8, 32], strides = [1, 1]} : vector<8x128xf32> to vector<8x32xf32>
      %106 = arith.negf %105 : vector<8x32xf32>
      %107 = math.exp %106 : vector<8x32xf32>
      %cst_56 = arith.constant 1.000000e+00 : f32
      %108 = vector.broadcast %cst_56 : f32 to vector<8x32xf32>
      %109 = arith.addf %108, %107 : vector<8x32xf32>
      %110 = arith.divf %108, %109 : vector<8x32xf32>
      %111 = vector.extract_strided_slice %104 {offsets = [0, 32], sizes = [8, 32], strides = [1, 1]} : vector<8x128xf32> to vector<8x32xf32>
      %112 = arith.negf %111 : vector<8x32xf32>
      %113 = math.exp %112 : vector<8x32xf32>
      %cst_57 = arith.constant 1.000000e+00 : f32
      %114 = vector.broadcast %cst_57 : f32 to vector<8x32xf32>
      %115 = arith.addf %114, %113 : vector<8x32xf32>
      %116 = arith.divf %114, %115 : vector<8x32xf32>
      %117 = vector.extract_strided_slice %104 {offsets = [0, 64], sizes = [8, 32], strides = [1, 1]} : vector<8x128xf32> to vector<8x32xf32>
      %118 = math.tanh %117 : vector<8x32xf32>
      %119 = vector.extract_strided_slice %104 {offsets = [0, 96], sizes = [8, 32], strides = [1, 1]} : vector<8x128xf32> to vector<8x32xf32>
      %120 = arith.negf %119 : vector<8x32xf32>
      %121 = math.exp %120 : vector<8x32xf32>
      %cst_58 = arith.constant 1.000000e+00 : f32
      %122 = vector.broadcast %cst_58 : f32 to vector<8x32xf32>
      %123 = arith.addf %122, %121 : vector<8x32xf32>
      %124 = arith.divf %122, %123 : vector<8x32xf32>
      %125 = arith.mulf %116, %94 : vector<8x32xf32>
      %126 = arith.mulf %110, %118 : vector<8x32xf32>
      %127 = arith.addf %125, %126 : vector<8x32xf32>
      %128 = math.tanh %127 : vector<8x32xf32>
      %129 = arith.mulf %124, %128 : vector<8x32xf32>
      %c0_59 = arith.constant 0 : index
      %c2_60 = arith.constant 2 : index
      %c0_61 = arith.constant 0 : index
      %c0_62 = arith.constant 0 : index
      %130 = vector.load %arg6[%c0_59, %c2_60, %c0_61, %c0_62] : memref<1x4x8x32xf32, #tpu.memory_space<vmem>>, vector<1x1x8x32xf32>
      %131 = vector.shape_cast %130 : vector<1x1x8x32xf32> to vector<8x32xf32>
      %132 = vector.shape_cast %129 : vector<8x32xf32> to vector<1x1x8x32xf32>
      tpu.vector_store %arg6[%c0_59, %c2_60, %c0_61, %c0_62], %132 {strides = array<i32>} : memref<1x4x8x32xf32, #tpu.memory_space<vmem>>, vector<1x1x8x32xf32>,
      %c3 = arith.constant 3 : index
      %c0_63 = arith.constant 0 : index
      %c0_64 = arith.constant 0 : index
      %133 = vector.load %arg9[%c3, %c0_63, %c0_64] : memref<4x8x128xf32, #tpu.memory_space<vmem>>, vector<1x8x128xf32>
      %134 = vector.shape_cast %133 : vector<1x8x128xf32> to vector<8x128xf32>
      %135 = arith.truncf %129 : vector<8x32xf32> to vector<8x32xbf16>
      %cst_65 = arith.constant dense<0.000000e+00> : vector<8x128xf32>
      %136 = tpu.matmul %135, %17, %cst_65 {dimension_numbers = #tpu.dot_dimension_numbers<[1], [0], [0], [1], [0, 0, 1, 1], [], []>} : vector<8x32xbf16>, vector<32x128xbf16>, vector<8x128xf32> -> vector<8x128xf32>
      %137 = arith.addf %134, %136 : vector<8x128xf32>
      %138 = vector.extract_strided_slice %137 {offsets = [0, 0], sizes = [8, 32], strides = [1, 1]} : vector<8x128xf32> to vector<8x32xf32>
      %139 = arith.negf %138 : vector<8x32xf32>
      %140 = math.exp %139 : vector<8x32xf32>
      %cst_66 = arith.constant 1.000000e+00 : f32
      %141 = vector.broadcast %cst_66 : f32 to vector<8x32xf32>
      %142 = arith.addf %141, %140 : vector<8x32xf32>
      %143 = arith.divf %141, %142 : vector<8x32xf32>
      %144 = vector.extract_strided_slice %137 {offsets = [0, 32], sizes = [8, 32], strides = [1, 1]} : vector<8x128xf32> to vector<8x32xf32>
      %145 = arith.negf %144 : vector<8x32xf32>
      %146 = math.exp %145 : vector<8x32xf32>
      %cst_67 = arith.constant 1.000000e+00 : f32
      %147 = vector.broadcast %cst_67 : f32 to vector<8x32xf32>
      %148 = arith.addf %147, %146 : vector<8x32xf32>
      %149 = arith.divf %147, %148 : vector<8x32xf32>
      %150 = vector.extract_strided_slice %137 {offsets = [0, 64], sizes = [8, 32], strides = [1, 1]} : vector<8x128xf32> to vector<8x32xf32>
      %151 = math.tanh %150 : vector<8x32xf32>
      %152 = vector.extract_strided_slice %137 {offsets = [0, 96], sizes = [8, 32], strides = [1, 1]} : vector<8x128xf32> to vector<8x32xf32>
      %153 = arith.negf %152 : vector<8x32xf32>
      %154 = math.exp %153 : vector<8x32xf32>
      %cst_68 = arith.constant 1.000000e+00 : f32
      %155 = vector.broadcast %cst_68 : f32 to vector<8x32xf32>
      %156 = arith.addf %155, %154 : vector<8x32xf32>
      %157 = arith.divf %155, %156 : vector<8x32xf32>
      %158 = arith.mulf %149, %127 : vector<8x32xf32>
      %159 = arith.mulf %143, %151 : vector<8x32xf32>
      %160 = arith.addf %158, %159 : vector<8x32xf32>
      %161 = math.tanh %160 : vector<8x32xf32>
      %162 = arith.mulf %157, %161 : vector<8x32xf32>
      %c0_69 = arith.constant 0 : index
      %c3_70 = arith.constant 3 : index
      %c0_71 = arith.constant 0 : index
      %c0_72 = arith.constant 0 : index
      %163 = vector.load %arg6[%c0_69, %c3_70, %c0_71, %c0_72] : memref<1x4x8x32xf32, #tpu.memory_space<vmem>>, vector<1x1x8x32xf32>
      %164 = vector.shape_cast %163 : vector<1x1x8x32xf32> to vector<8x32xf32>
      %165 = vector.shape_cast %162 : vector<8x32xf32> to vector<1x1x8x32xf32>
      tpu.vector_store %arg6[%c0_69, %c3_70, %c0_71, %c0_72], %165 {strides = array<i32>} : memref<1x4x8x32xf32, #tpu.memory_space<vmem>>, vector<1x1x8x32xf32>,
      %c0_73 = arith.constant 0 : index
      %c0_74 = arith.constant 0 : index
      %166 = vector.load %arg10[%c0_73, %c0_74] : memref<8x32xf32, #tpu.memory_space<vmem>>, vector<8x32xf32>
      tpu.vector_store %arg10[%c0_73, %c0_74], %162 {strides = array<i32>} : memref<8x32xf32, #tpu.memory_space<vmem>>, vector<8x32xf32>,
      %c0_75 = arith.constant 0 : index
      %c0_76 = arith.constant 0 : index
      %167 = vector.load %arg11[%c0_75, %c0_76] : memref<8x32xf32, #tpu.memory_space<vmem>>, vector<8x32xf32>
      tpu.vector_store %arg11[%c0_75, %c0_76], %160 {strides = array<i32>} : memref<8x32xf32, #tpu.memory_space<vmem>>, vector<8x32xf32>,
    } else {
    }
    %c1_i32 = arith.constant 1 : i32
    %21 = arith.cmpi eq, %arg0, %c1_i32 : i32
    %22 = arith.extui %21 : i1 to i32
    %c0_i32_17 = arith.constant 0 : i32
    %23 = arith.cmpi ne, %22, %c0_i32_17 : i32
    scf.if %23 {
      %c0_28 = arith.constant 0 : index
      %c0_29 = arith.constant 0 : index
      %32 = vector.load %arg10[%c0_28, %c0_29] : memref<8x32xf32, #tpu.memory_space<vmem>>, vector<8x32xf32>
      %c0_30 = arith.constant 0 : index
      %c0_31 = arith.constant 0 : index
      %33 = vector.load %arg11[%c0_30, %c0_31] : memref<8x32xf32, #tpu.memory_space<vmem>>, vector<8x32xf32>
      %c3 = arith.constant 3 : index
      %c0_32 = arith.constant 0 : index
      %c0_33 = arith.constant 0 : index
      %34 = vector.load %arg9[%c3, %c0_32, %c0_33] : memref<4x8x128xf32, #tpu.memory_space<vmem>>, vector<1x8x128xf32>
      %35 = vector.shape_cast %34 : vector<1x8x128xf32> to vector<8x128xf32>
      %36 = arith.truncf %32 : vector<8x32xf32> to vector<8x32xbf16>
      %cst_34 = arith.constant dense<0.000000e+00> : vector<8x128xf32>
      %37 = tpu.matmul %36, %17, %cst_34 {dimension_numbers = #tpu.dot_dimension_numbers<[1], [0], [0], [1], [0, 0, 1, 1], [], []>} : vector<8x32xbf16>, vector<32x128xbf16>, vector<8x128xf32> -> vector<8x128xf32>
      %38 = arith.addf %35, %37 : vector<8x128xf32>
      %39 = vector.extract_strided_slice %38 {offsets = [0, 0], sizes = [8, 32], strides = [1, 1]} : vector<8x128xf32> to vector<8x32xf32>
      %40 = arith.negf %39 : vector<8x32xf32>
      %41 = math.exp %40 : vector<8x32xf32>
      %cst_35 = arith.constant 1.000000e+00 : f32
      %42 = vector.broadcast %cst_35 : f32 to vector<8x32xf32>
      %43 = arith.addf %42, %41 : vector<8x32xf32>
      %44 = arith.divf %42, %43 : vector<8x32xf32>
      %45 = vector.extract_strided_slice %38 {offsets = [0, 32], sizes = [8, 32], strides = [1, 1]} : vector<8x128xf32> to vector<8x32xf32>
      %46 = arith.negf %45 : vector<8x32xf32>
      %47 = math.exp %46 : vector<8x32xf32>
      %cst_36 = arith.constant 1.000000e+00 : f32
      %48 = vector.broadcast %cst_36 : f32 to vector<8x32xf32>
      %49 = arith.addf %48, %47 : vector<8x32xf32>
      %50 = arith.divf %48, %49 : vector<8x32xf32>
      %51 = vector.extract_strided_slice %38 {offsets = [0, 64], sizes = [8, 32], strides = [1, 1]} : vector<8x128xf32> to vector<8x32xf32>
      %52 = math.tanh %51 : vector<8x32xf32>
      %53 = vector.extract_strided_slice %38 {offsets = [0, 96], sizes = [8, 32], strides = [1, 1]} : vector<8x128xf32> to vector<8x32xf32>
      %54 = arith.negf %53 : vector<8x32xf32>
      %55 = math.exp %54 : vector<8x32xf32>
      %cst_37 = arith.constant 1.000000e+00 : f32
      %56 = vector.broadcast %cst_37 : f32 to vector<8x32xf32>
      %57 = arith.addf %56, %55 : vector<8x32xf32>
      %58 = arith.divf %56, %57 : vector<8x32xf32>
      %59 = arith.mulf %50, %33 : vector<8x32xf32>
      %60 = arith.mulf %44, %52 : vector<8x32xf32>
      %61 = arith.addf %59, %60 : vector<8x32xf32>
      %62 = math.tanh %61 : vector<8x32xf32>
      %63 = arith.mulf %58, %62 : vector<8x32xf32>
      %c0_38 = arith.constant 0 : index
      %c3_39 = arith.constant 3 : index
      %c0_40 = arith.constant 0 : index
      %c0_41 = arith.constant 0 : index
      %64 = vector.load %arg6[%c0_38, %c3_39, %c0_40, %c0_41] : memref<1x4x8x32xf32, #tpu.memory_space<vmem>>, vector<1x1x8x32xf32>
      %65 = vector.shape_cast %64 : vector<1x1x8x32xf32> to vector<8x32xf32>
      %66 = vector.shape_cast %63 : vector<8x32xf32> to vector<1x1x8x32xf32>
      tpu.vector_store %arg6[%c0_38, %c3_39, %c0_40, %c0_41], %66 {strides = array<i32>} : memref<1x4x8x32xf32, #tpu.memory_space<vmem>>, vector<1x1x8x32xf32>,
      %c2 = arith.constant 2 : index
      %c0_42 = arith.constant 0 : index
      %c0_43 = arith.constant 0 : index
      %67 = vector.load %arg9[%c2, %c0_42, %c0_43] : memref<4x8x128xf32, #tpu.memory_space<vmem>>, vector<1x8x128xf32>
      %68 = vector.shape_cast %67 : vector<1x8x128xf32> to vector<8x128xf32>
      %69 = arith.truncf %63 : vector<8x32xf32> to vector<8x32xbf16>
      %cst_44 = arith.constant dense<0.000000e+00> : vector<8x128xf32>
      %70 = tpu.matmul %69, %17, %cst_44 {dimension_numbers = #tpu.dot_dimension_numbers<[1], [0], [0], [1], [0, 0, 1, 1], [], []>} : vector<8x32xbf16>, vector<32x128xbf16>, vector<8x128xf32> -> vector<8x128xf32>
      %71 = arith.addf %68, %70 : vector<8x128xf32>
      %72 = vector.extract_strided_slice %71 {offsets = [0, 0], sizes = [8, 32], strides = [1, 1]} : vector<8x128xf32> to vector<8x32xf32>
      %73 = arith.negf %72 : vector<8x32xf32>
      %74 = math.exp %73 : vector<8x32xf32>
      %cst_45 = arith.constant 1.000000e+00 : f32
      %75 = vector.broadcast %cst_45 : f32 to vector<8x32xf32>
      %76 = arith.addf %75, %74 : vector<8x32xf32>
      %77 = arith.divf %75, %76 : vector<8x32xf32>
      %78 = vector.extract_strided_slice %71 {offsets = [0, 32], sizes = [8, 32], strides = [1, 1]} : vector<8x128xf32> to vector<8x32xf32>
      %79 = arith.negf %78 : vector<8x32xf32>
      %80 = math.exp %79 : vector<8x32xf32>
      %cst_46 = arith.constant 1.000000e+00 : f32
      %81 = vector.broadcast %cst_46 : f32 to vector<8x32xf32>
      %82 = arith.addf %81, %80 : vector<8x32xf32>
      %83 = arith.divf %81, %82 : vector<8x32xf32>
      %84 = vector.extract_strided_slice %71 {offsets = [0, 64], sizes = [8, 32], strides = [1, 1]} : vector<8x128xf32> to vector<8x32xf32>
      %85 = math.tanh %84 : vector<8x32xf32>
      %86 = vector.extract_strided_slice %71 {offsets = [0, 96], sizes = [8, 32], strides = [1, 1]} : vector<8x128xf32> to vector<8x32xf32>
      %87 = arith.negf %86 : vector<8x32xf32>
      %88 = math.exp %87 : vector<8x32xf32>
      %cst_47 = arith.constant 1.000000e+00 : f32
      %89 = vector.broadcast %cst_47 : f32 to vector<8x32xf32>
      %90 = arith.addf %89, %88 : vector<8x32xf32>
      %91 = arith.divf %89, %90 : vector<8x32xf32>
      %92 = arith.mulf %83, %61 : vector<8x32xf32>
      %93 = arith.mulf %77, %85 : vector<8x32xf32>
      %94 = arith.addf %92, %93 : vector<8x32xf32>
      %95 = math.tanh %94 : vector<8x32xf32>
      %96 = arith.mulf %91, %95 : vector<8x32xf32>
      %c0_48 = arith.constant 0 : index
      %c2_49 = arith.constant 2 : index
      %c0_50 = arith.constant 0 : index
      %c0_51 = arith.constant 0 : index
      %97 = vector.load %arg6[%c0_48, %c2_49, %c0_50, %c0_51] : memref<1x4x8x32xf32, #tpu.memory_space<vmem>>, vector<1x1x8x32xf32>
      %98 = vector.shape_cast %97 : vector<1x1x8x32xf32> to vector<8x32xf32>
      %99 = vector.shape_cast %96 : vector<8x32xf32> to vector<1x1x8x32xf32>
      tpu.vector_store %arg6[%c0_48, %c2_49, %c0_50, %c0_51], %99 {strides = array<i32>} : memref<1x4x8x32xf32, #tpu.memory_space<vmem>>, vector<1x1x8x32xf32>,
      %c1 = arith.constant 1 : index
      %c0_52 = arith.constant 0 : index
      %c0_53 = arith.constant 0 : index
      %100 = vector.load %arg9[%c1, %c0_52, %c0_53] : memref<4x8x128xf32, #tpu.memory_space<vmem>>, vector<1x8x128xf32>
      %101 = vector.shape_cast %100 : vector<1x8x128xf32> to vector<8x128xf32>
      %102 = arith.truncf %96 : vector<8x32xf32> to vector<8x32xbf16>
      %cst_54 = arith.constant dense<0.000000e+00> : vector<8x128xf32>
      %103 = tpu.matmul %102, %17, %cst_54 {dimension_numbers = #tpu.dot_dimension_numbers<[1], [0], [0], [1], [0, 0, 1, 1], [], []>} : vector<8x32xbf16>, vector<32x128xbf16>, vector<8x128xf32> -> vector<8x128xf32>
      %104 = arith.addf %101, %103 : vector<8x128xf32>
      %105 = vector.extract_strided_slice %104 {offsets = [0, 0], sizes = [8, 32], strides = [1, 1]} : vector<8x128xf32> to vector<8x32xf32>
      %106 = arith.negf %105 : vector<8x32xf32>
      %107 = math.exp %106 : vector<8x32xf32>
      %cst_55 = arith.constant 1.000000e+00 : f32
      %108 = vector.broadcast %cst_55 : f32 to vector<8x32xf32>
      %109 = arith.addf %108, %107 : vector<8x32xf32>
      %110 = arith.divf %108, %109 : vector<8x32xf32>
      %111 = vector.extract_strided_slice %104 {offsets = [0, 32], sizes = [8, 32], strides = [1, 1]} : vector<8x128xf32> to vector<8x32xf32>
      %112 = arith.negf %111 : vector<8x32xf32>
      %113 = math.exp %112 : vector<8x32xf32>
      %cst_56 = arith.constant 1.000000e+00 : f32
      %114 = vector.broadcast %cst_56 : f32 to vector<8x32xf32>
      %115 = arith.addf %114, %113 : vector<8x32xf32>
      %116 = arith.divf %114, %115 : vector<8x32xf32>
      %117 = vector.extract_strided_slice %104 {offsets = [0, 64], sizes = [8, 32], strides = [1, 1]} : vector<8x128xf32> to vector<8x32xf32>
      %118 = math.tanh %117 : vector<8x32xf32>
      %119 = vector.extract_strided_slice %104 {offsets = [0, 96], sizes = [8, 32], strides = [1, 1]} : vector<8x128xf32> to vector<8x32xf32>
      %120 = arith.negf %119 : vector<8x32xf32>
      %121 = math.exp %120 : vector<8x32xf32>
      %cst_57 = arith.constant 1.000000e+00 : f32
      %122 = vector.broadcast %cst_57 : f32 to vector<8x32xf32>
      %123 = arith.addf %122, %121 : vector<8x32xf32>
      %124 = arith.divf %122, %123 : vector<8x32xf32>
      %125 = arith.mulf %116, %94 : vector<8x32xf32>
      %126 = arith.mulf %110, %118 : vector<8x32xf32>
      %127 = arith.addf %125, %126 : vector<8x32xf32>
      %128 = math.tanh %127 : vector<8x32xf32>
      %129 = arith.mulf %124, %128 : vector<8x32xf32>
      %c0_58 = arith.constant 0 : index
      %c1_59 = arith.constant 1 : index
      %c0_60 = arith.constant 0 : index
      %c0_61 = arith.constant 0 : index
      %130 = vector.load %arg6[%c0_58, %c1_59, %c0_60, %c0_61] : memref<1x4x8x32xf32, #tpu.memory_space<vmem>>, vector<1x1x8x32xf32>
      %131 = vector.shape_cast %130 : vector<1x1x8x32xf32> to vector<8x32xf32>
      %132 = vector.shape_cast %129 : vector<8x32xf32> to vector<1x1x8x32xf32>
      tpu.vector_store %arg6[%c0_58, %c1_59, %c0_60, %c0_61], %132 {strides = array<i32>} : memref<1x4x8x32xf32, #tpu.memory_space<vmem>>, vector<1x1x8x32xf32>,
      %c0_62 = arith.constant 0 : index
      %c0_63 = arith.constant 0 : index
      %c0_64 = arith.constant 0 : index
      %133 = vector.load %arg9[%c0_62, %c0_63, %c0_64] : memref<4x8x128xf32, #tpu.memory_space<vmem>>, vector<1x8x128xf32>
      %134 = vector.shape_cast %133 : vector<1x8x128xf32> to vector<8x128xf32>
      %135 = arith.truncf %129 : vector<8x32xf32> to vector<8x32xbf16>
      %cst_65 = arith.constant dense<0.000000e+00> : vector<8x128xf32>
      %136 = tpu.matmul %135, %17, %cst_65 {dimension_numbers = #tpu.dot_dimension_numbers<[1], [0], [0], [1], [0, 0, 1, 1], [], []>} : vector<8x32xbf16>, vector<32x128xbf16>, vector<8x128xf32> -> vector<8x128xf32>
      %137 = arith.addf %134, %136 : vector<8x128xf32>
      %138 = vector.extract_strided_slice %137 {offsets = [0, 0], sizes = [8, 32], strides = [1, 1]} : vector<8x128xf32> to vector<8x32xf32>
      %139 = arith.negf %138 : vector<8x32xf32>
      %140 = math.exp %139 : vector<8x32xf32>
      %cst_66 = arith.constant 1.000000e+00 : f32
      %141 = vector.broadcast %cst_66 : f32 to vector<8x32xf32>
      %142 = arith.addf %141, %140 : vector<8x32xf32>
      %143 = arith.divf %141, %142 : vector<8x32xf32>
      %144 = vector.extract_strided_slice %137 {offsets = [0, 32], sizes = [8, 32], strides = [1, 1]} : vector<8x128xf32> to vector<8x32xf32>
      %145 = arith.negf %144 : vector<8x32xf32>
      %146 = math.exp %145 : vector<8x32xf32>
      %cst_67 = arith.constant 1.000000e+00 : f32
      %147 = vector.broadcast %cst_67 : f32 to vector<8x32xf32>
      %148 = arith.addf %147, %146 : vector<8x32xf32>
      %149 = arith.divf %147, %148 : vector<8x32xf32>
      %150 = vector.extract_strided_slice %137 {offsets = [0, 64], sizes = [8, 32], strides = [1, 1]} : vector<8x128xf32> to vector<8x32xf32>
      %151 = math.tanh %150 : vector<8x32xf32>
      %152 = vector.extract_strided_slice %137 {offsets = [0, 96], sizes = [8, 32], strides = [1, 1]} : vector<8x128xf32> to vector<8x32xf32>
      %153 = arith.negf %152 : vector<8x32xf32>
      %154 = math.exp %153 : vector<8x32xf32>
      %cst_68 = arith.constant 1.000000e+00 : f32
      %155 = vector.broadcast %cst_68 : f32 to vector<8x32xf32>
      %156 = arith.addf %155, %154 : vector<8x32xf32>
      %157 = arith.divf %155, %156 : vector<8x32xf32>
      %158 = arith.mulf %149, %127 : vector<8x32xf32>
      %159 = arith.mulf %143, %151 : vector<8x32xf32>
      %160 = arith.addf %158, %159 : vector<8x32xf32>
      %161 = math.tanh %160 : vector<8x32xf32>
      %162 = arith.mulf %157, %161 : vector<8x32xf32>
      %c0_69 = arith.constant 0 : index
      %c0_70 = arith.constant 0 : index
      %c0_71 = arith.constant 0 : index
      %c0_72 = arith.constant 0 : index
      %163 = vector.load %arg6[%c0_69, %c0_70, %c0_71, %c0_72] : memref<1x4x8x32xf32, #tpu.memory_space<vmem>>, vector<1x1x8x32xf32>
      %164 = vector.shape_cast %163 : vector<1x1x8x32xf32> to vector<8x32xf32>
      %165 = vector.shape_cast %162 : vector<8x32xf32> to vector<1x1x8x32xf32>
      tpu.vector_store %arg6[%c0_69, %c0_70, %c0_71, %c0_72], %165 {strides = array<i32>} : memref<1x4x8x32xf32, #tpu.memory_space<vmem>>, vector<1x1x8x32xf32>,
      %c0_73 = arith.constant 0 : index
      %c0_74 = arith.constant 0 : index
      %166 = vector.load %arg10[%c0_73, %c0_74] : memref<8x32xf32, #tpu.memory_space<vmem>>, vector<8x32xf32>
      tpu.vector_store %arg10[%c0_73, %c0_74], %162 {strides = array<i32>} : memref<8x32xf32, #tpu.memory_space<vmem>>, vector<8x32xf32>,
      %c0_75 = arith.constant 0 : index
      %c0_76 = arith.constant 0 : index
      %167 = vector.load %arg11[%c0_75, %c0_76] : memref<8x32xf32, #tpu.memory_space<vmem>>, vector<8x32xf32>
      tpu.vector_store %arg11[%c0_75, %c0_76], %160 {strides = array<i32>} : memref<8x32xf32, #tpu.memory_space<vmem>>, vector<8x32xf32>,
    } else {
    }
    %c0_18 = arith.constant 0 : index
    %c0_19 = arith.constant 0 : index
    %24 = vector.load %arg10[%c0_18, %c0_19] : memref<8x32xf32, #tpu.memory_space<vmem>>, vector<8x32xf32>
    %c0_20 = arith.constant 0 : index
    %c0_21 = arith.constant 0 : index
    %c0_22 = arith.constant 0 : index
    %25 = vector.load %arg7[%c0_20, %c0_21, %c0_22] : memref<1x8x32xf32, #tpu.memory_space<vmem>>, vector<1x8x32xf32>
    %26 = vector.shape_cast %25 : vector<1x8x32xf32> to vector<8x32xf32>
    %27 = vector.shape_cast %24 : vector<8x32xf32> to vector<1x8x32xf32>
    tpu.vector_store %arg7[%c0_20, %c0_21, %c0_22], %27 {strides = array<i32>} : memref<1x8x32xf32, #tpu.memory_space<vmem>>, vector<1x8x32xf32>,
    %c0_23 = arith.constant 0 : index
    %c0_24 = arith.constant 0 : index
    %28 = vector.load %arg11[%c0_23, %c0_24] : memref<8x32xf32, #tpu.memory_space<vmem>>, vector<8x32xf32>
    %c0_25 = arith.constant 0 : index
    %c0_26 = arith.constant 0 : index
    %c0_27 = arith.constant 0 : index
    %29 = vector.load %arg8[%c0_25, %c0_26, %c0_27] : memref<1x8x32xf32, #tpu.memory_space<vmem>>, vector<1x8x32xf32>
    %30 = vector.shape_cast %29 : vector<1x8x32xf32> to vector<8x32xf32>
    %31 = vector.shape_cast %28 : vector<8x32xf32> to vector<1x8x32xf32>
    tpu.vector_store %arg8[%c0_25, %c0_26, %c0_27], %31 {strides = array<i32>} : memref<1x8x32xf32, #tpu.memory_space<vmem>>, vector<1x8x32xf32>,
    return
  }
  func.func @transform_0(%arg0: i32, %arg1: i32) -> (i32, i32, i32) {
    %c2_i32 = arith.constant 2 : i32
    %0 = arith.muli %c2_i32, %arg1 : i32
    %c0_i32 = arith.constant 0 : i32
    %1 = arith.subi %c0_i32, %0 : i32
    %2 = arith.muli %arg0, %1 : i32
    %3 = arith.addi %arg1, %2 : i32
    %c0_i32_0 = arith.constant 0 : i32
    %c0_i32_1 = arith.constant 0 : i32
    %c0_i32_2 = arith.constant 0 : i32
    return %3, %c0_i32_0, %c0_i32_1 : i32, i32, i32
  }
  func.func @transform_1(%arg0: i32, %arg1: i32) -> (i32, i32, i32) {
    %c0_i32 = arith.constant 0 : i32
    %c0_i32_0 = arith.constant 0 : i32
    %c0_i32_1 = arith.constant 0 : i32
    return %arg0, %c0_i32, %c0_i32_0 : i32, i32, i32
  }
  func.func @transform_2(%arg0: i32, %arg1: i32) -> (i32, i32, i32) {
    %c0_i32 = arith.constant 0 : i32
    %c0_i32_0 = arith.constant 0 : i32
    %c0_i32_1 = arith.constant 0 : i32
    return %arg0, %c0_i32, %c0_i32_0 : i32, i32, i32
  }
  func.func @transform_3(%arg0: i32, %arg1: i32) -> (i32, i32, i32) {
    %c0_i32 = arith.constant 0 : i32
    %c0_i32_0 = arith.constant 0 : i32
    %c0_i32_1 = arith.constant 0 : i32
    return %arg0, %c0_i32, %c0_i32_0 : i32, i32, i32
  }
  func.func @transform_4(%arg0: i32, %arg1: i32) -> (i32, i32, i32, i32) {
    %c2_i32 = arith.constant 2 : i32
    %0 = arith.muli %c2_i32, %arg1 : i32
    %c0_i32 = arith.constant 0 : i32
    %1 = arith.subi %c0_i32, %0 : i32
    %2 = arith.muli %arg0, %1 : i32
    %3 = arith.addi %arg1, %2 : i32
    %c0_i32_0 = arith.constant 0 : i32
    %c0_i32_1 = arith.constant 0 : i32
    %c0_i32_2 = arith.constant 0 : i32
    return %arg0, %3, %c0_i32_0, %c0_i32_1 : i32, i32, i32, i32
  }
  func.func @transform_5(%arg0: i32, %arg1: i32) -> (i32, i32, i32) {
    %c0_i32 = arith.constant 0 : i32
    %c0_i32_0 = arith.constant 0 : i32
    %c0_i32_1 = arith.constant 0 : i32
    return %arg0, %c0_i32, %c0_i32_0 : i32, i32, i32
  }
  func.func @transform_6(%arg0: i32, %arg1: i32) -> (i32, i32, i32) {
    %c0_i32 = arith.constant 0 : i32
    %c0_i32_0 = arith.constant 0 : i32
    %c0_i32_1 = arith.constant 0 : i32
    return %arg0, %c0_i32, %c0_i32_0 : i32, i32, i32
  }
}

</mosaic_0001>

<llo_original>
// kernel: pblstm_layer_forward.1
$region0: #{pblstm_layer_forward.1}
  #allocation0 [shape = 'u32[]', space=smem, size = 0x4, offset = 0x4, fixed_abs, tag = 'smem constant byte address 0x4 - core index']
  #allocation1 [shape = 'u32[144,128]{1,0:T(1,128)}', space=vmem, size = 0x12000, scoped, tag = 'internal scratch']
  #allocation2 [shape = 'f32[4,8,128]{2,1,0:T(8,128)}', space=vmem, size = 0x4000, scoped, tag = 'scratch operand']
  #allocation3 [shape = 'f32[8,32]{1,0:T(8,128)}', space=vmem, size = 0x1000, scoped, tag = 'scratch operand']
  #allocation4 [shape = 'f32[8,32]{1,0:T(8,128)}', space=vmem, size = 0x1000, scoped, tag = 'scratch operand']
  %s0 = inlined_call_operand.vmem [shape: f32[4,8,32], index: 0, kind: input, shape index: {}]
  %s1 = inlined_call_operand.vmem [shape: bf16[2,32,128], index: 1, kind: input, shape index: {}]
  %s2 = inlined_call_operand.vmem [shape: bf16[2,32,128], index: 2, kind: input, shape index: {}]
  %s3 = inlined_call_operand.vmem [shape: f32[2,1,128], index: 3, kind: input, shape index: {}]
  %s4 = inlined_call_operand.vmem [shape: f32[2,4,8,32], index: 4, kind: output, shape index: {0}]
  %s5 = inlined_call_operand.vmem [shape: f32[2,8,32], index: 5, kind: output, shape index: {1}]
  %s6 = inlined_call_operand.vmem [shape: f32[2,8,32], index: 6, kind: output, shape index: {2}]
  %7 = xla_tuple %s4, %s5, %s6
  %s8 = sld [smem:[#allocation0]]
  $region77: #{pblstm_layer_forward.1} parent=0
    _
  %s10 = ssub.s32 1, %s8
  %s11 = scalar_select 0, %s10, %s8
  loop: start=0, step=1, limit=4
  $region2: #{pblstm_layer_forward.1} parent=0 // loop_pre_header
    _
  $region3: #{pblstm_layer_forward.1} parent=0 // loop_header
    %s13 = sphi 0, %s17
    %p14 = scmp.ge.s32.totalorder %s13, 4
    %s20 = sphi 0, %s32
    %s21 = sphi 0, %s28
    %s22 = sphi 0, %s20
    %s23 = sphi 0, %s21
    %s24 = sphi 0, %s22
    %s25 = sphi 0, %s23
    %s43 = sphi 0, %s45
    %s46 = sphi 0, %s43
    %s47 = sphi 0, %s46
    %s63 = sphi 0, %s47
    %s69 = sphi 0, %s71
    %s72 = sphi 0, %s69
    %s73 = sphi 0, %s72
    %s89 = sphi 0, %s73
    %s95 = sphi 0, %s97
    %s98 = sphi 0, %s95
    %s99 = sphi 0, %s98
    %s115 = sphi 0, %s99
    %s121 = sphi 0, %s123
    %s124 = sphi 0, %s121
    %s125 = sphi 0, %s124
    %s141 = sphi 0, %s125
    %s157 = sphi 0, %s159
    %s160 = sphi 0, %s157
    %s161 = sphi 0, %s160
    %s177 = sphi 0, %s161
    %s183 = sphi 0, %s185
    %s186 = sphi 0, %s183
    %s187 = sphi 0, %s186
    %s203 = sphi 0, %s187
    %s209 = sphi 0, %s211
    %s212 = sphi 0, %s209
    %s213 = sphi 0, %s212
    %s229 = sphi 0, %s213
  $region4: #{pblstm_layer_forward.1} parent=0 // loop_header_branch
    %16 = sbr.rel (%p14) target = $region8
  $region5: #{pblstm_layer_forward.1} parent=0 // loop_body
    %s18 = ssub.s32 %s13, 1
    %s19 = ssub.s32 %s13, 2
    %s26 = sadd.s32 1, %s21
    %p27 = scmp.ge.s32.totalorder %s26, 1
    %s28 = scalar_select %p27, 0, %s26
    %s29 = sadd.s32 1, %s20
    %s30 = scalar_select %p27, %s29, %s20
    %p31 = scmp.ge.s32.totalorder %s30, 2
    %s32 = scalar_select %p31, 0, %s30
    %s33 = smul.u32 %s21, 2
    %s34 = ssub.s32 0, %s33
    %s35 = smul.u32 %s20, %s34
    %s36 = sadd.s32 %s21, %s35
    %s37 = smul.u32 %s28, 2
    %s38 = ssub.s32 0, %s37
    %s39 = smul.u32 %s32, %s38
    %s40 = sadd.s32 %s28, %s39
    %s41 = ssub.s32 %s36, %s40
    %p42 = scmp.eq.s32.totalorder %s41, 0
    %s44 = sadd.s32 %s43, 1
    %s45 = scalar_select %p42, %s43, %s44
    %p48 = pneg %p42
    %p49 = scmp.eq.s32.totalorder %s13, 1
    %p50 = por %p48, %p49
    %p51 = scmp.ne.s32.totalorder %s43, %s46
    %p52 = scmp.eq.s32.totalorder %s13, 0
    %p53 = por %p51, %p52
    %p54 = scmp.ne.s32.totalorder %s43, %s46
    %p55 = scmp.eq.s32.totalorder %s18, 1
    %p56 = por %p54, %p55
    %p57 = scmp.ne.s32.totalorder %s46, %s47
    %p58 = scmp.eq.s32.totalorder %s18, 0
    %p59 = por %p57, %p58
    %p60 = scmp.ne.s32.totalorder %s46, %s47
    %p61 = scmp.eq.s32.totalorder %s19, 1
    %p62 = por %p60, %p61
    %p64 = scmp.ne.s32.totalorder %s47, %s63
    %p65 = scmp.eq.s32.totalorder %s19, 0
    %p66 = por %p64, %p65
    %s67 = ssub.s32 %s20, %s32
    %p68 = scmp.eq.s32.totalorder %s67, 0
    %s70 = sadd.s32 %s69, 1
    %s71 = scalar_select %p68, %s69, %s70
    %p74 = pneg %p68
    %p75 = scmp.eq.s32.totalorder %s13, 1
    %p76 = por %p74, %p75
    %p77 = scmp.ne.s32.totalorder %s69, %s72
    %p78 = scmp.eq.s32.totalorder %s13, 0
    %p79 = por %p77, %p78
    %p80 = scmp.ne.s32.totalorder %s69, %s72
    %p81 = scmp.eq.s32.totalorder %s18, 1
    %p82 = por %p80, %p81
    %p83 = scmp.ne.s32.totalorder %s72, %s73
    %p84 = scmp.eq.s32.totalorder %s18, 0
    %p85 = por %p83, %p84
    %p86 = scmp.ne.s32.totalorder %s72, %s73
    %p87 = scmp.eq.s32.totalorder %s19, 1
    %p88 = por %p86, %p87
    %p90 = scmp.ne.s32.totalorder %s73, %s89
    %p91 = scmp.eq.s32.totalorder %s19, 0
    %p92 = por %p90, %p91
    %s93 = ssub.s32 %s20, %s32
    %p94 = scmp.eq.s32.totalorder %s93, 0
    %s96 = sadd.s32 %s95, 1
    %s97 = scalar_select %p94, %s95, %s96
    %p100 = pneg %p94
    %p101 = scmp.eq.s32.totalorder %s13, 1
    %p102 = por %p100, %p101
    %p103 = scmp.ne.s32.totalorder %s95, %s98
    %p104 = scmp.eq.s32.totalorder %s13, 0
    %p105 = por %p103, %p104
    %p106 = scmp.ne.s32.totalorder %s95, %s98
    %p107 = scmp.eq.s32.totalorder %s18, 1
    %p108 = por %p106, %p107
    %p109 = scmp.ne.s32.totalorder %s98, %s99
    %p110 = scmp.eq.s32.totalorder %s18, 0
    %p111 = por %p109, %p110
    %p112 = scmp.ne.s32.totalorder %s98, %s99
    %p113 = scmp.eq.s32.totalorder %s19, 1
    %p114 = por %p112, %p113
    %p116 = scmp.ne.s32.totalorder %s99, %s115
    %p117 = scmp.eq.s32.totalorder %s19, 0
    %p118 = por %p116, %p117
    %s119 = ssub.s32 %s20, %s32
    %p120 = scmp.eq.s32.totalorder %s119, 0
    %s122 = sadd.s32 %s121, 1
    %s123 = scalar_select %p120, %s121, %s122
    %p126 = pneg %p120
    %p127 = scmp.eq.s32.totalorder %s13, 1
    %p128 = por %p126, %p127
    %p129 = scmp.ne.s32.totalorder %s121, %s124
    %p130 = scmp.eq.s32.totalorder %s13, 0
    %p131 = por %p129, %p130
    %p132 = scmp.ne.s32.totalorder %s121, %s124
    %p133 = scmp.eq.s32.totalorder %s18, 1
    %p134 = por %p132, %p133
    %p135 = scmp.ne.s32.totalorder %s124, %s125
    %p136 = scmp.eq.s32.totalorder %s18, 0
    %p137 = por %p135, %p136
    %p138 = scmp.ne.s32.totalorder %s124, %s125
    %p139 = scmp.eq.s32.totalorder %s19, 1
    %p140 = por %p138, %p139
    %p142 = scmp.ne.s32.totalorder %s125, %s141
    %p143 = scmp.eq.s32.totalorder %s19, 0
    %p144 = por %p142, %p143
    %s145 = smul.u32 %s21, 2
    %s146 = ssub.s32 0, %s145
    %s147 = smul.u32 %s20, %s146
    %s148 = sadd.s32 %s21, %s147
    %s149 = smul.u32 %s28, 2
    %s150 = ssub.s32 0, %s149
    %s151 = smul.u32 %s32, %s150
    %s152 = sadd.s32 %s28, %s151
    %s153 = ssub.s32 %s20, %s32
    %s154 = ssub.s32 %s148, %s152
    %s155 = sor.u32 %s153, %s154
    %p156 = scmp.eq.s32.totalorder %s155, 0
    %s158 = sadd.s32 %s157, 1
    %s159 = scalar_select %p156, %s157, %s158
    %p162 = pneg %p156
    %p163 = scmp.eq.s32.totalorder %s13, 1
    %p164 = por %p162, %p163
    %p165 = scmp.ne.s32.totalorder %s157, %s160
    %p166 = scmp.eq.s32.totalorder %s13, 0
    %p167 = por %p165, %p166
    %p168 = scmp.ne.s32.totalorder %s157, %s160
    %p169 = scmp.eq.s32.totalorder %s18, 1
    %p170 = por %p168, %p169
    %p171 = scmp.ne.s32.totalorder %s160, %s161
    %p172 = scmp.eq.s32.totalorder %s18, 0
    %p173 = por %p171, %p172
    %p174 = scmp.ne.s32.totalorder %s160, %s161
    %p175 = scmp.eq.s32.totalorder %s19, 1
    %p176 = por %p174, %p175
    %p178 = scmp.ne.s32.totalorder %s161, %s177
    %p179 = scmp.eq.s32.totalorder %s19, 0
    %p180 = por %p178, %p179
    %s181 = ssub.s32 %s20, %s32
    %p182 = scmp.eq.s32.totalorder %s181, 0
    %s184 = sadd.s32 %s183, 1
    %s185 = scalar_select %p182, %s183, %s184
    %p188 = pneg %p182
    %p189 = scmp.eq.s32.totalorder %s13, 1
    %p190 = por %p188, %p189
    %p191 = scmp.ne.s32.totalorder %s183, %s186
    %p192 = scmp.eq.s32.totalorder %s13, 0
    %p193 = por %p191, %p192
    %p194 = scmp.ne.s32.totalorder %s183, %s186
    %p195 = scmp.eq.s32.totalorder %s18, 1
    %p196 = por %p194, %p195
    %p197 = scmp.ne.s32.totalorder %s186, %s187
    %p198 = scmp.eq.s32.totalorder %s18, 0
    %p199 = por %p197, %p198
    %p200 = scmp.ne.s32.totalorder %s186, %s187
    %p201 = scmp.eq.s32.totalorder %s19, 1
    %p202 = por %p200, %p201
    %p204 = scmp.ne.s32.totalorder %s187, %s203
    %p205 = scmp.eq.s32.totalorder %s19, 0
    %p206 = por %p204, %p205
    %s207 = ssub.s32 %s20, %s32
    %p208 = scmp.eq.s32.totalorder %s207, 0
    %s210 = sadd.s32 %s209, 1
    %s211 = scalar_select %p208, %s209, %s210
    %p214 = pneg %p208
    %p215 = scmp.eq.s32.totalorder %s13, 1
    %p216 = por %p214, %p215
    %p217 = scmp.ne.s32.totalorder %s209, %s212
    %p218 = scmp.eq.s32.totalorder %s13, 0
    %p219 = por %p217, %p218
    %p220 = scmp.ne.s32.totalorder %s209, %s212
    %p221 = scmp.eq.s32.totalorder %s18, 1
    %p222 = por %p220, %p221
    %p223 = scmp.ne.s32.totalorder %s212, %s213
    %p224 = scmp.eq.s32.totalorder %s18, 0
    %p225 = por %p223, %p224
    %p226 = scmp.ne.s32.totalorder %s212, %s213
    %p227 = scmp.eq.s32.totalorder %s19, 1
    %p228 = por %p226, %p227
    %p230 = scmp.ne.s32.totalorder %s213, %s229
    %p231 = scmp.eq.s32.totalorder %s19, 0
    %p232 = por %p230, %p231
    %p233 = scmp.le.s32.totalorder 1, %s13
    %p234 = scmp.lt.s32.totalorder %s13, 3
    %p235 = pnand %p233, %p234
    %p236 = pneg %p235
    // Predicated region
    $region9: #{pblstm_layer_forward.1} parent=5 // pred_check
      _
    $region10: #{pblstm_layer_forward.1} parent=5 // pred_check_branch
      %238 = sbr.rel (%p235) target = $region12
    $region11: #{pblstm_layer_forward.1} parent=5 // pred_region
      %s239 = ssub.s32 %s13, 1
    $region12: #{pblstm_layer_forward.1} parent=5 // pred_fallthru
      _
    %p240 = scmp.lt.s32.totalorder %s13, 2
    // Predicated region
    $region13: #{pblstm_layer_forward.1} parent=5 // pred_check
      %p241 = pneg %p240
    $region14: #{pblstm_layer_forward.1} parent=5 // pred_check_branch
      %243 = sbr.rel (%p241) target = $region16
    $region15: #{pblstm_layer_forward.1} parent=5 // pred_region
      // Predicated region
      $region17: #{pblstm_layer_forward.1} parent=15 // pred_check
        %p244 = pneg %p53
      $region18: #{pblstm_layer_forward.1} parent=15 // pred_check_branch
        %246 = sbr.rel (%p244) target = $region20
      $region19: #{pblstm_layer_forward.1} parent=15 // pred_region
        %s247 = smul.u32 %s21, 2
        %s248 = ssub.s32 0, %s247
        %s249 = smul.u32 %s20, %s248
        %s250 = sadd.s32 %s21, %s249
        %s251 = smul.u32 4, %s250
        %p252 = scmp.lt.s32.totalorder %s251, 3
        %s253 = scalar_select %p252, %s251, 3
        %s254 = smul.addr %s253, 8
        %s255 = scalar_lea.vmem %s0, %s254
        %s256 = smul.u32 %s21, 2
        %s257 = ssub.s32 0, %s256
        %s258 = smul.u32 %s20, %s257
        %s259 = sadd.s32 %s21, %s258
        %s260 = smul.u32 4, %s259
      $region20: #{pblstm_layer_forward.1} parent=15 // pred_fallthru
        _
      // Predicated region
      $region21: #{pblstm_layer_forward.1} parent=15 // pred_check
        %p261 = pneg %p79
      $region22: #{pblstm_layer_forward.1} parent=15 // pred_check_branch
        %263 = sbr.rel (%p261) target = $region24
      $region23: #{pblstm_layer_forward.1} parent=15 // pred_region
        %p264 = scmp.lt.s32.totalorder %s20, 1
        %s265 = scalar_select %p264, %s20, 1
        %s266 = smul.addr %s265, 4
        %s267 = smul.addr %s266, 4
        %s268 = scalar_lea.vmem %s1, %s267
      $region24: #{pblstm_layer_forward.1} parent=15 // pred_fallthru
        _
      // Predicated region
      $region25: #{pblstm_layer_forward.1} parent=15 // pred_check
        %p269 = pneg %p105
      $region26: #{pblstm_layer_forward.1} parent=15 // pred_check_branch
        %271 = sbr.rel (%p269) target = $region28
      $region27: #{pblstm_layer_forward.1} parent=15 // pred_region
        %p272 = scmp.lt.s32.totalorder %s20, 1
        %s273 = scalar_select %p272, %s20, 1
        %s274 = smul.addr %s273, 4
        %s275 = smul.addr %s274, 4
        %s276 = scalar_lea.vmem %s2, %s275
      $region28: #{pblstm_layer_forward.1} parent=15 // pred_fallthru
        _
      // Predicated region
      $region29: #{pblstm_layer_forward.1} parent=15 // pred_check
        %p277 = pneg %p131
      $region30: #{pblstm_layer_forward.1} parent=15 // pred_check_branch
        %279 = sbr.rel (%p277) target = $region32
      $region31: #{pblstm_layer_forward.1} parent=15 // pred_region
        %p280 = scmp.lt.s32.totalorder %s20, 1
        %s281 = scalar_select %p280, %s20, 1
        %s282 = scalar_lea.vmem %s3, %s281
      $region32: #{pblstm_layer_forward.1} parent=15 // pred_fallthru
        _
    $region16: #{pblstm_layer_forward.1} parent=5 // pred_fallthru
      _
    %p283 = scmp.le.s32.totalorder 1, %s13
    %p284 = scmp.lt.s32.totalorder %s13, 3
    %p285 = pnand %p283, %p284
    %p286 = pneg %p285
    // Predicated region
    $region33: #{pblstm_layer_forward.1} parent=5 // pred_check
      _
    $region34: #{pblstm_layer_forward.1} parent=5 // pred_check_branch
      %288 = sbr.rel (%p285) target = $region36
    $region35: #{pblstm_layer_forward.1} parent=5 // pred_region
      %s289 = ssub.s32 %s13, 1
      %s290 = smul.u32 %s23, 2
      %s291 = ssub.s32 0, %s290
      %s292 = smul.u32 %s22, %s291
      %s293 = sadd.s32 %s23, %s292
      %s294 = smul.u32 4, %s293
      %p295 = scmp.lt.s32.totalorder %s294, 3
      %s296 = scalar_select %p295, %s294, 3
      %s297 = smul.addr %s296, 8
      %s298 = scalar_lea.vmem %s0, %s297
      %p299 = pneg %p59
      %p300 = pneg %p56
      %p301 = scmp.lt.s32.totalorder %s22, 1
      %s302 = scalar_select %p301, %s22, 1
      %s303 = smul.addr %s302, 4
      %s304 = smul.addr %s303, 4
      %s305 = scalar_lea.vmem %s1, %s304
      %p306 = pneg %p85
      %p307 = pneg %p82
      %p308 = scmp.lt.s32.totalorder %s22, 1
      %s309 = scalar_select %p308, %s22, 1
      %s310 = smul.addr %s309, 4
      %s311 = smul.addr %s310, 4
      %s312 = scalar_lea.vmem %s2, %s311
      %p313 = pneg %p111
      %p314 = pneg %p108
      %p315 = scmp.lt.s32.totalorder %s22, 1
      %s316 = scalar_select %p315, %s22, 1
      %s317 = scalar_lea.vmem %s3, %s316
      %p318 = pneg %p137
      %p319 = pneg %p134
      %p320 = pneg %p173
      %p321 = pneg %p170
      %s322 = smul.u32 %s23, 2
      %s323 = ssub.s32 0, %s322
      %s324 = smul.u32 %s22, %s323
      %s325 = sadd.s32 %s23, %s324
      %s326 = smul.u32 4, %s325
      %p327 = scmp.lt.s32.totalorder %s22, 1
      %s328 = scalar_select %p327, %s22, 1
      %p329 = scmp.lt.s32.totalorder %s326, 3
      %s330 = scalar_select %p329, %s326, 3
      %s331 = smul.addr %s328, 4
      %s332 = sadd.s32 %s330, %s331
      %s333 = smul.addr %s332, 8
      %s334 = scalar_lea.vmem %s4, %s333
      %p335 = pneg %p199
      %p336 = pneg %p196
      %p337 = scmp.lt.s32.totalorder %s22, 1
      %s338 = scalar_select %p337, %s22, 1
      %s339 = smul.addr %s338, 8
      %s340 = scalar_lea.vmem %s5, %s339
      %p341 = pneg %p225
      %p342 = pneg %p222
      %p343 = scmp.lt.s32.totalorder %s22, 1
      %s344 = scalar_select %p343, %s22, 1
      %s345 = smul.addr %s344, 8
      %s346 = scalar_lea.vmem %s6, %s345
      %s347 = smul.u32 %s23, 2
      %s348 = ssub.s32 0, %s347
      %s349 = smul.u32 %s22, %s348
      %s350 = sadd.s32 %s23, %s349
      %s351 = smul.u32 4, %s350
      %p352 = scmp.lt.s32.totalorder %s351, 3
      %s353 = scalar_select %p352, %s351, 3
      %s354 = smul.addr %s353, 8
      %s355 = scalar_lea.vmem %s0, %s354
      %s356 = smul.u32 %s23, 2
      %s357 = ssub.s32 0, %s356
      %s358 = smul.u32 %s22, %s357
      %s359 = sadd.s32 %s23, %s358
      %s360 = smul.u32 4, %s359
      %p361 = scmp.lt.s32.totalorder %s22, 1
      %s362 = scalar_select %p361, %s22, 1
      %s363 = smul.addr %s362, 4
      %s364 = smul.addr %s363, 4
      %s365 = scalar_lea.vmem %s1, %s364
      %p366 = scmp.lt.s32.totalorder %s22, 1
      %s367 = scalar_select %p366, %s22, 1
      %s368 = smul.addr %s367, 4
      %s369 = smul.addr %s368, 4
      %s370 = scalar_lea.vmem %s2, %s369
      %p371 = scmp.lt.s32.totalorder %s22, 1
      %s372 = scalar_select %p371, %s22, 1
      %s373 = scalar_lea.vmem %s3, %s372
      %s374 = smul.u32 %s23, 2
      %s375 = ssub.s32 0, %s374
      %s376 = smul.u32 %s22, %s375
      %s377 = sadd.s32 %s23, %s376
      %s378 = smul.u32 4, %s377
      %p379 = scmp.lt.s32.totalorder %s22, 1
      %s380 = scalar_select %p379, %s22, 1
      %p381 = scmp.lt.s32.totalorder %s378, 3
      %s382 = scalar_select %p381, %s378, 3
      %s383 = smul.addr %s380, 4
      %s384 = sadd.s32 %s382, %s383
      %s385 = smul.addr %s384, 8
      %s386 = scalar_lea.vmem %s4, %s385
      %s387 = smul.u32 %s23, 2
      %s388 = ssub.s32 0, %s387
      %s389 = smul.u32 %s22, %s388
      %s390 = sadd.s32 %s23, %s389
      %s391 = smul.u32 4, %s390
      %p392 = scmp.lt.s32.totalorder %s22, 1
      %s393 = scalar_select %p392, %s22, 1
      %s394 = smul.addr %s393, 8
      %s395 = scalar_lea.vmem %s5, %s394
      %p396 = scmp.lt.s32.totalorder %s22, 1
      %s397 = scalar_select %p396, %s22, 1
      %s398 = smul.addr %s397, 8
      %s399 = scalar_lea.vmem %s6, %s398
      %p401 = scmp.eq.s32.totalorder %s23, 0
      // Predicated region
      $region37: #{pblstm_layer_forward.1} parent=35 // pred_check
        %p402 = pneg %p401
      $region38: #{pblstm_layer_forward.1} parent=35 // pred_check_branch
        %404 = sbr.rel (%p402) target = $region40
      $region39: #{pblstm_layer_forward.1} parent=35 // pred_region
        %vm405 = vcmask 261120
        %406 = vst.msk [vmem:[#allocation3] sm:$0xff] %vm405, 0.0
        %407 = vst.msk [vmem:[#allocation4] sm:$0xff] %vm405, 0.0
      $region40: #{pblstm_layer_forward.1} parent=35 // pred_fallthru
        _
      %v408 = vld [vmem:[%s355] sm:$0xff]
      %v409 = vld [vmem:[%s355 + $0x8] sm:$0xff]
      %v410 = vld [vmem:[%s355 + $0x10] sm:$0xff]
      %v411 = vld [vmem:[%s355 + $0x18] sm:$0xff]
      %v412 = vpack.c.bf16 %v409, %v408
      %v413 = vpack.c.bf16 %v411, %v410
      %v414 = vld [vmem:[%s365] sm:$0xf]
      %v415 = vld [vmem:[%s365 + $0x4] sm:$0xf]
      %v416 = vld [vmem:[%s365 + $0x8] sm:$0xf]
      %v417 = vld [vmem:[%s365 + $0xc] sm:$0xf]
      %v422 = vunpack.c.l.b16 %v414
      %v423 = vunpack.c.l.b16 %v415
      %v424 = vunpack.c.l.b16 %v416
      %v425 = vunpack.c.l.b16 %v417
      %v426 = vpack.c.b16 %v423, %v422
      %v427 = vpack.c.b16 %v425, %v424
      %vm430 = vcmask 261120
      %v432 = vsel %vm430, %v412, 0
      %v435 = vsel %vm430, %v413, 0
      %437 = vmatprep.subr.bf16.mxu0 0
      %438 = vmatpush1.bf16.msra.mxu0 0
      %439 = vmatprep.subr.bf16.mxu0 0
      %440 = vmatpush1.bf16.msra.mxu0 0
      %441 = vmatprep.subr.bf16.mxu0 0
      %442 = vmatpush1.bf16.msra.mxu0 0
      %443 = vmatprep.subr.bf16.mxu0 0
      %444 = vmatpush1.bf16.msra.mxu0 0
      %445 = vmatprep.subr.bf16.mxu0 0
      %446 = vmatpush1.bf16.msra.mxu0 0
      %447 = vmatprep.subr.bf16.mxu0 0
      %448 = vmatpush1.bf16.msra.mxu0 0
      %449 = vmatprep.subr.bf16.mxu0 0
      %450 = vmatpush1.bf16.msra.mxu0 %v427
      %451 = vmatprep.subr.bf16.mxu0 0
      %452 = vmatpush1.bf16.msra.mxu0 %v426
      %453 = vmatprep.subr.bf16.mxu0 0
      %454 = vmatpush2.bf16.msra.mxu0 0
      %455 = vmatprep.subr.bf16.mxu0 0
      %456 = vmatpush2.bf16.msra.mxu0 0
      %457 = vmatprep.subr.bf16.mxu0 0
      %458 = vmatpush2.bf16.msra.mxu0 0
      %459 = vmatprep.subr.bf16.mxu0 0
      %460 = vmatpush2.bf16.msra.mxu0 0
      %461 = vmatprep.subr.bf16.mxu0 0
      %462 = vmatpush2.bf16.msra.mxu0 0
      %463 = vmatprep.subr.bf16.mxu0 0
      %464 = vmatpush2.bf16.msra.mxu0 0
      %465 = vmatprep.subr.bf16.mxu0 0
      %466 = vmatpush2.bf16.msra.mxu0 0
      %467 = vmatprep.subr.bf16.mxu0 0
      %468 = vmatpush2.bf16.msra.mxu0 0
      %469 = vmatprep.mubr.bf16.mxu0 0
      %470 = vmatmul.mubr.bf16.gmra.mxu0 %v432
      %v471 = vpop.f32.mrf.mxu0
      %v472 = vadd.f32 0.0, %v471
      %v473 = vpop.f32.mrf.mxu0
      %v474 = vpop.f32.mrf.mxu0
      %v475 = vadd.f32 0.0, %v474
      %v476 = vpop.f32.mrf.mxu0
      %477 = vmatprep.mubr.bf16.mxu0 0
      %478 = vmatmul.mubr.bf16.gmra.mxu0 %v435
      %v479 = vpop.f32.mrf.mxu0
      %v480 = vadd.f32 0.0, %v479
      %v481 = vpop.f32.mrf.mxu0
      %v482 = vpop.f32.mrf.mxu0
      %v483 = vadd.f32 0.0, %v482
      %v484 = vpop.f32.mrf.mxu0
      %485 = vdwg.mxu0
      %v486 = vld [vmem:[%s373] sm:$0x1]
      %v488 = vlaneseq
      %v489 = vshrl.u32 %v488, 7
      %v490 = vsub.s32 0, %v489
      %v491 = vrot.slane %v486, %v490
      %v493 = vadd.f32 %v472, %v491
      %v494 = vadd.f32 %v475, %v491
      %v495 = vadd.f32 %v480, %v491
      %v496 = vadd.f32 %v483, %v491
      %497 = vst [vmem:[#allocation2] sm:$0xff] %v493
      %498 = vst [vmem:[#allocation2 + $0x8] sm:$0xff] %v494
      %499 = vst [vmem:[#allocation2 + $0x10] sm:$0xff] %v495
      %500 = vst [vmem:[#allocation2 + $0x18] sm:$0xff] %v496
      %v501 = vld [vmem:[%s370] sm:$0xf]
      %v502 = vld [vmem:[%s370 + $0x4] sm:$0xf]
      %v503 = vld [vmem:[%s370 + $0x8] sm:$0xf]
      %v504 = vld [vmem:[%s370 + $0xc] sm:$0xf]
      %p505 = scmp.eq.s32.totalorder %s22, 0
      // Predicated region
      $region41: #{pblstm_layer_forward.1} parent=35 // pred_check
        %p506 = pneg %p505
      $region42: #{pblstm_layer_forward.1} parent=35 // pred_check_branch
        %508 = sbr.rel (%p506) target = $region44
      $region43: #{pblstm_layer_forward.1} parent=35 // pred_region
        %v509 = vld [vmem:[#allocation3] sm:$0xff]
        %v510 = vld [vmem:[#allocation4] sm:$0xff]
        %v511 = vld [vmem:[#allocation2] sm:$0xff]
        %v512 = vpack.c.bf16 %v509, %v509
        %v517 = vunpack.c.l.b16 %v501
        %v518 = vunpack.c.l.b16 %v502
        %v519 = vunpack.c.l.b16 %v503
        %v520 = vunpack.c.l.b16 %v504
        %v521 = vpack.c.b16 %v518, %v517
        %v522 = vpack.c.b16 %v520, %v519
        %v526 = vsel %vm430, %v512, 0
        %528 = vmatprep.subr.bf16.mxu0 0
        %529 = vmatpush1.bf16.msra.mxu0 0
        %530 = vmatprep.subr.bf16.mxu0 0
        %531 = vmatpush1.bf16.msra.mxu0 0
        %532 = vmatprep.subr.bf16.mxu0 0
        %533 = vmatpush1.bf16.msra.mxu0 0
        %534 = vmatprep.subr.bf16.mxu0 0
        %535 = vmatpush1.bf16.msra.mxu0 0
        %536 = vmatprep.subr.bf16.mxu0 0
        %537 = vmatpush1.bf16.msra.mxu0 0
        %538 = vmatprep.subr.bf16.mxu0 0
        %539 = vmatpush1.bf16.msra.mxu0 0
        %540 = vmatprep.subr.bf16.mxu0 0
        %541 = vmatpush1.bf16.msra.mxu0 %v522
        %542 = vmatprep.subr.bf16.mxu0 0
        %543 = vmatpush1.bf16.msra.mxu0 %v521
        %544 = vmatprep.subr.bf16.mxu0 0
        %545 = vmatpush2.bf16.msra.mxu0 0
        %546 = vmatprep.subr.bf16.mxu0 0
        %547 = vmatpush2.bf16.msra.mxu0 0
        %548 = vmatprep.subr.bf16.mxu0 0
        %549 = vmatpush2.bf16.msra.mxu0 0
        %550 = vmatprep.subr.bf16.mxu0 0
        %551 = vmatpush2.bf16.msra.mxu0 0
        %552 = vmatprep.subr.bf16.mxu0 0
        %553 = vmatpush2.bf16.msra.mxu0 0
        %554 = vmatprep.subr.bf16.mxu0 0
        %555 = vmatpush2.bf16.msra.mxu0 0
        %556 = vmatprep.subr.bf16.mxu0 0
        %557 = vmatpush2.bf16.msra.mxu0 0
        %558 = vmatprep.subr.bf16.mxu0 0
        %559 = vmatpush2.bf16.msra.mxu0 0
        %560 = vmatprep.mubr.bf16.mxu0 0
        %561 = vmatmul.mubr.bf16.gmra.mxu0 %v526
        %v562 = vpop.f32.mrf.mxu0
        %v563 = vadd.f32 0.0, %v562
        %v564 = vpop.f32.mrf.mxu0
        %v565 = vpop.f32.mrf.mxu0
        %v566 = vpop.f32.mrf.mxu0
        %567 = vdwg.mxu0
        %v568 = vadd.f32 %v511, %v563
        %v569 = vxor.u32 %v568, 2147483648
        %v570 = vmul.f32 %v569, 1.442695
        %v571 = vpow.pop %v570
        %v572 = vadd.f32 %v571, 1.0
        %v573 = vrcp.pop %v572
        %v574 = vmul.f32 1.0, %v573
        %v575 = vtanh.pop %v568
        %577 = vrot.lane.b32.xlu0 %v510, 32
        %v578 = vpop.permute.xlu0 %577
        %v580 = vmul.f32 %v574, %v578
        %582 = vrot.lane.b32.xlu0 %v575, 64
        %v583 = vpop.permute.xlu0 %582
        %v585 = vmul.f32 %v574, %v583
        %587 = vrot.lane.b32.xlu0 %v585, 32
        %v588 = vpop.permute.xlu0 %587
        %v590 = vadd.f32 %v580, %v588
        %v591 = vtanh.pop %v590
        %593 = vrot.lane.b32.xlu0 %v591, 64
        %v594 = vpop.permute.xlu0 %593
        %v596 = vmul.f32 %v574, %v594
        %598 = vrot.lane.b32.xlu0 %v596, 32
        %v599 = vpop.permute.xlu0 %598
        %601 = vst.msk [vmem:[%s386] sm:$0xff] %vm430, %v599
        %s602 = scalar_lea.vmem [#allocation2], 8
        %v603 = vld [vmem:[%s602] sm:$0xff]
        %v604 = vpack.c.bf16 %v596, %v596
        %606 = vrot.lane.b32.xlu0 %v604, 32
        %v607 = vpop.permute.xlu0 %606
        %v609 = vsel %vm430, %v607, 0
        %611 = vmatprep.subr.bf16.mxu0 0
        %612 = vmatpush1.bf16.msra.mxu0 0
        %613 = vmatprep.subr.bf16.mxu0 0
        %614 = vmatpush1.bf16.msra.mxu0 0
        %615 = vmatprep.subr.bf16.mxu0 0
        %616 = vmatpush1.bf16.msra.mxu0 0
        %617 = vmatprep.subr.bf16.mxu0 0
        %618 = vmatpush1.bf16.msra.mxu0 0
        %619 = vmatprep.subr.bf16.mxu0 0
        %620 = vmatpush1.bf16.msra.mxu0 0
        %621 = vmatprep.subr.bf16.mxu0 0
        %622 = vmatpush1.bf16.msra.mxu0 0
        %623 = vmatprep.subr.bf16.mxu0 0
        %624 = vmatpush1.bf16.msra.mxu0 %v522
        %625 = vmatprep.subr.bf16.mxu0 0
        %626 = vmatpush1.bf16.msra.mxu0 %v521
        %627 = vmatprep.subr.bf16.mxu0 0
        %628 = vmatpush2.bf16.msra.mxu0 0
        %629 = vmatprep.subr.bf16.mxu0 0
        %630 = vmatpush2.bf16.msra.mxu0 0
        %631 = vmatprep.subr.bf16.mxu0 0
        %632 = vmatpush2.bf16.msra.mxu0 0
        %633 = vmatprep.subr.bf16.mxu0 0
        %634 = vmatpush2.bf16.msra.mxu0 0
        %635 = vmatprep.subr.bf16.mxu0 0
        %636 = vmatpush2.bf16.msra.mxu0 0
        %637 = vmatprep.subr.bf16.mxu0 0
        %638 = vmatpush2.bf16.msra.mxu0 0
        %639 = vmatprep.subr.bf16.mxu0 0
        %640 = vmatpush2.bf16.msra.mxu0 0
        %641 = vmatprep.subr.bf16.mxu0 0
        %642 = vmatpush2.bf16.msra.mxu0 0
        %643 = vmatprep.mubr.bf16.mxu0 0
        %644 = vmatmul.mubr.bf16.gmra.mxu0 %v609
        %v645 = vpop.f32.mrf.mxu0
        %v646 = vadd.f32 0.0, %v645
        %v647 = vpop.f32.mrf.mxu0
        %v648 = vpop.f32.mrf.mxu0
        %v649 = vpop.f32.mrf.mxu0
        %650 = vdwg.mxu0
        %v651 = vadd.f32 %v603, %v646
        %v652 = vxor.u32 %v651, 2147483648
        %v653 = vmul.f32 %v652, 1.442695
        %v654 = vpow.pop %v653
        %v655 = vadd.f32 %v654, 1.0
        %v656 = vrcp.pop %v655
        %v657 = vmul.f32 1.0, %v656
        %v658 = vtanh.pop %v651
        %v659 = vmul.f32 %v657, %v590
        %661 = vrot.lane.b32.xlu0 %v658, 64
        %v662 = vpop.permute.xlu0 %661
        %v664 = vmul.f32 %v657, %v662
        %666 = vrot.lane.b32.xlu0 %v664, 32
        %v667 = vpop.permute.xlu0 %666
        %v669 = vadd.f32 %v659, %v667
        %v670 = vtanh.pop %v669
        %672 = vrot.lane.b32.xlu0 %v670, 64
        %v673 = vpop.permute.xlu0 %672
        %v675 = vmul.f32 %v657, %v673
        %677 = vrot.lane.b32.xlu0 %v675, 32
        %v678 = vpop.permute.xlu0 %677
        %s680 = scalar_lea.vmem %s386, 8
        %681 = vst.msk [vmem:[%s680] sm:$0xff] %vm430, %v678
        %s682 = scalar_lea.vmem [#allocation2], 16
        %v683 = vld [vmem:[%s682] sm:$0xff]
        %v684 = vpack.c.bf16 %v675, %v675
        %686 = vrot.lane.b32.xlu0 %v684, 32
        %v687 = vpop.permute.xlu0 %686
        %v689 = vsel %vm430, %v687, 0
        %691 = vmatprep.subr.bf16.mxu0 0
        %692 = vmatpush1.bf16.msra.mxu0 0
        %693 = vmatprep.subr.bf16.mxu0 0
        %694 = vmatpush1.bf16.msra.mxu0 0
        %695 = vmatprep.subr.bf16.mxu0 0
        %696 = vmatpush1.bf16.msra.mxu0 0
        %697 = vmatprep.subr.bf16.mxu0 0
        %698 = vmatpush1.bf16.msra.mxu0 0
        %699 = vmatprep.subr.bf16.mxu0 0
        %700 = vmatpush1.bf16.msra.mxu0 0
        %701 = vmatprep.subr.bf16.mxu0 0
        %702 = vmatpush1.bf16.msra.mxu0 0
        %703 = vmatprep.subr.bf16.mxu0 0
        %704 = vmatpush1.bf16.msra.mxu0 %v522
        %705 = vmatprep.subr.bf16.mxu0 0
        %706 = vmatpush1.bf16.msra.mxu0 %v521
        %707 = vmatprep.subr.bf16.mxu0 0
        %708 = vmatpush2.bf16.msra.mxu0 0
        %709 = vmatprep.subr.bf16.mxu0 0
        %710 = vmatpush2.bf16.msra.mxu0 0
        %711 = vmatprep.subr.bf16.mxu0 0
        %712 = vmatpush2.bf16.msra.mxu0 0
        %713 = vmatprep.subr.bf16.mxu0 0
        %714 = vmatpush2.bf16.msra.mxu0 0
        %715 = vmatprep.subr.bf16.mxu0 0
        %716 = vmatpush2.bf16.msra.mxu0 0
        %717 = vmatprep.subr.bf16.mxu0 0
        %718 = vmatpush2.bf16.msra.mxu0 0
        %719 = vmatprep.subr.bf16.mxu0 0
        %720 = vmatpush2.bf16.msra.mxu0 0
        %721 = vmatprep.subr.bf16.mxu0 0
        %722 = vmatpush2.bf16.msra.mxu0 0
        %723 = vmatprep.mubr.bf16.mxu0 0
        %724 = vmatmul.mubr.bf16.gmra.mxu0 %v689
        %v725 = vpop.f32.mrf.mxu0
        %v726 = vadd.f32 0.0, %v725
        %v727 = vpop.f32.mrf.mxu0
        %v728 = vpop.f32.mrf.mxu0
        %v729 = vpop.f32.mrf.mxu0
        %730 = vdwg.mxu0
        %v731 = vadd.f32 %v683, %v726
        %v732 = vxor.u32 %v731, 2147483648
        %v733 = vmul.f32 %v732, 1.442695
        %v734 = vpow.pop %v733
        %v735 = vadd.f32 %v734, 1.0
        %v736 = vrcp.pop %v735
        %v737 = vmul.f32 1.0, %v736
        %v738 = vtanh.pop %v731
        %v739 = vmul.f32 %v737, %v669
        %741 = vrot.lane.b32.xlu0 %v738, 64
        %v742 = vpop.permute.xlu0 %741
        %v744 = vmul.f32 %v737, %v742
        %746 = vrot.lane.b32.xlu0 %v744, 32
        %v747 = vpop.permute.xlu0 %746
        %v749 = vadd.f32 %v739, %v747
        %v750 = vtanh.pop %v749
        %752 = vrot.lane.b32.xlu0 %v750, 64
        %v753 = vpop.permute.xlu0 %752
        %v755 = vmul.f32 %v737, %v753
        %757 = vrot.lane.b32.xlu0 %v755, 32
        %v758 = vpop.permute.xlu0 %757
        %s760 = scalar_lea.vmem %s386, 16
        %761 = vst.msk [vmem:[%s760] sm:$0xff] %vm430, %v758
        %s762 = scalar_lea.vmem [#allocation2], 24
        %v763 = vld [vmem:[%s762] sm:$0xff]
        %v764 = vpack.c.bf16 %v755, %v755
        %766 = vrot.lane.b32.xlu0 %v764, 32
        %v767 = vpop.permute.xlu0 %766
        %v769 = vsel %vm430, %v767, 0
        %771 = vmatprep.subr.bf16.mxu0 0
        %772 = vmatpush1.bf16.msra.mxu0 0
        %773 = vmatprep.subr.bf16.mxu0 0
        %774 = vmatpush1.bf16.msra.mxu0 0
        %775 = vmatprep.subr.bf16.mxu0 0
        %776 = vmatpush1.bf16.msra.mxu0 0
        %777 = vmatprep.subr.bf16.mxu0 0
        %778 = vmatpush1.bf16.msra.mxu0 0
        %779 = vmatprep.subr.bf16.mxu0 0
        %780 = vmatpush1.bf16.msra.mxu0 0
        %781 = vmatprep.subr.bf16.mxu0 0
        %782 = vmatpush1.bf16.msra.mxu0 0
        %783 = vmatprep.subr.bf16.mxu0 0
        %784 = vmatpush1.bf16.msra.mxu0 %v522
        %785 = vmatprep.subr.bf16.mxu0 0
        %786 = vmatpush1.bf16.msra.mxu0 %v521
        %787 = vmatprep.subr.bf16.mxu0 0
        %788 = vmatpush2.bf16.msra.mxu0 0
        %789 = vmatprep.subr.bf16.mxu0 0
        %790 = vmatpush2.bf16.msra.mxu0 0
        %791 = vmatprep.subr.bf16.mxu0 0
        %792 = vmatpush2.bf16.msra.mxu0 0
        %793 = vmatprep.subr.bf16.mxu0 0
        %794 = vmatpush2.bf16.msra.mxu0 0
        %795 = vmatprep.subr.bf16.mxu0 0
        %796 = vmatpush2.bf16.msra.mxu0 0
        %797 = vmatprep.subr.bf16.mxu0 0
        %798 = vmatpush2.bf16.msra.mxu0 0
        %799 = vmatprep.subr.bf16.mxu0 0
        %800 = vmatpush2.bf16.msra.mxu0 0
        %801 = vmatprep.subr.bf16.mxu0 0
        %802 = vmatpush2.bf16.msra.mxu0 0
        %803 = vmatprep.mubr.bf16.mxu0 0
        %804 = vmatmul.mubr.bf16.gmra.mxu0 %v769
        %v805 = vpop.f32.mrf.mxu0
        %v806 = vadd.f32 0.0, %v805
        %v807 = vpop.f32.mrf.mxu0
        %v808 = vpop.f32.mrf.mxu0
        %v809 = vpop.f32.mrf.mxu0
        %810 = vdwg.mxu0
        %v811 = vadd.f32 %v763, %v806
        %v812 = vxor.u32 %v811, 2147483648
        %v813 = vmul.f32 %v812, 1.442695
        %v814 = vpow.pop %v813
        %v815 = vadd.f32 %v814, 1.0
        %v816 = vrcp.pop %v815
        %v817 = vmul.f32 1.0, %v816
        %v818 = vtanh.pop %v811
        %v819 = vmul.f32 %v817, %v749
        %821 = vrot.lane.b32.xlu0 %v818, 64
        %v822 = vpop.permute.xlu0 %821
        %v824 = vmul.f32 %v817, %v822
        %826 = vrot.lane.b32.xlu0 %v824, 32
        %v827 = vpop.permute.xlu0 %826
        %v829 = vadd.f32 %v819, %v827
        %v830 = vtanh.pop %v829
        %832 = vrot.lane.b32.xlu0 %v830, 64
        %v833 = vpop.permute.xlu0 %832
        %v835 = vmul.f32 %v817, %v833
        %837 = vrot.lane.b32.xlu0 %v835, 32
        %v838 = vpop.permute.xlu0 %837
        %s840 = scalar_lea.vmem %s386, 24
        %841 = vst.msk [vmem:[%s840] sm:$0xff] %vm430, %v838
        %842 = vst.msk [vmem:[#allocation3] sm:$0xff] %vm430, %v838
        %844 = vrot.lane.b32.xlu0 %v829, 96
        %v845 = vpop.permute.xlu0 %844
        %847 = vst.msk [vmem:[#allocation4] sm:$0xff] %vm430, %v845
      $region44: #{pblstm_layer_forward.1} parent=35 // pred_fallthru
        _
      %p848 = scmp.eq.s32.totalorder %s22, 1
      // Predicated region
      $region45: #{pblstm_layer_forward.1} parent=35 // pred_check
        %p849 = pneg %p848
      $region46: #{pblstm_layer_forward.1} parent=35 // pred_check_branch
        %851 = sbr.rel (%p849) target = $region48
      $region47: #{pblstm_layer_forward.1} parent=35 // pred_region
        %v852 = vld [vmem:[#allocation3] sm:$0xff]
        %v853 = vld [vmem:[#allocation4] sm:$0xff]
        %s854 = scalar_lea.vmem [#allocation2], 24
        %v855 = vld [vmem:[%s854] sm:$0xff]
        %v856 = vpack.c.bf16 %v852, %v852
        %v861 = vunpack.c.l.b16 %v501
        %v862 = vunpack.c.l.b16 %v502
        %v863 = vunpack.c.l.b16 %v503
        %v864 = vunpack.c.l.b16 %v504
        %v865 = vpack.c.b16 %v862, %v861
        %v866 = vpack.c.b16 %v864, %v863
        %v870 = vsel %vm430, %v856, 0
        %872 = vmatprep.subr.bf16.mxu0 0
        %873 = vmatpush1.bf16.msra.mxu0 0
        %874 = vmatprep.subr.bf16.mxu0 0
        %875 = vmatpush1.bf16.msra.mxu0 0
        %876 = vmatprep.subr.bf16.mxu0 0
        %877 = vmatpush1.bf16.msra.mxu0 0
        %878 = vmatprep.subr.bf16.mxu0 0
        %879 = vmatpush1.bf16.msra.mxu0 0
        %880 = vmatprep.subr.bf16.mxu0 0
        %881 = vmatpush1.bf16.msra.mxu0 0
        %882 = vmatprep.subr.bf16.mxu0 0
        %883 = vmatpush1.bf16.msra.mxu0 0
        %884 = vmatprep.subr.bf16.mxu0 0
        %885 = vmatpush1.bf16.msra.mxu0 %v866
        %886 = vmatprep.subr.bf16.mxu0 0
        %887 = vmatpush1.bf16.msra.mxu0 %v865
        %888 = vmatprep.subr.bf16.mxu0 0
        %889 = vmatpush2.bf16.msra.mxu0 0
        %890 = vmatprep.subr.bf16.mxu0 0
        %891 = vmatpush2.bf16.msra.mxu0 0
        %892 = vmatprep.subr.bf16.mxu0 0
        %893 = vmatpush2.bf16.msra.mxu0 0
        %894 = vmatprep.subr.bf16.mxu0 0
        %895 = vmatpush2.bf16.msra.mxu0 0
        %896 = vmatprep.subr.bf16.mxu0 0
        %897 = vmatpush2.bf16.msra.mxu0 0
        %898 = vmatprep.subr.bf16.mxu0 0
        %899 = vmatpush2.bf16.msra.mxu0 0
        %900 = vmatprep.subr.bf16.mxu0 0
        %901 = vmatpush2.bf16.msra.mxu0 0
        %902 = vmatprep.subr.bf16.mxu0 0
        %903 = vmatpush2.bf16.msra.mxu0 0
        %904 = vmatprep.mubr.bf16.mxu0 0
        %905 = vmatmul.mubr.bf16.gmra.mxu0 %v870
        %v906 = vpop.f32.mrf.mxu0
        %v907 = vadd.f32 0.0, %v906
        %v908 = vpop.f32.mrf.mxu0
        %v909 = vpop.f32.mrf.mxu0
        %v910 = vpop.f32.mrf.mxu0
        %911 = vdwg.mxu0
        %v912 = vadd.f32 %v855, %v907
        %v913 = vxor.u32 %v912, 2147483648
        %v914 = vmul.f32 %v913, 1.442695
        %v915 = vpow.pop %v914
        %v916 = vadd.f32 %v915, 1.0
        %v917 = vrcp.pop %v916
        %v918 = vmul.f32 1.0, %v917
        %v919 = vtanh.pop %v912
        %921 = vrot.lane.b32.xlu0 %v853, 32
        %v922 = vpop.permute.xlu0 %921
        %v924 = vmul.f32 %v918, %v922
        %926 = vrot.lane.b32.xlu0 %v919, 64
        %v927 = vpop.permute.xlu0 %926
        %v929 = vmul.f32 %v918, %v927
        %931 = vrot.lane.b32.xlu0 %v929, 32
        %v932 = vpop.permute.xlu0 %931
        %v934 = vadd.f32 %v924, %v932
        %v935 = vtanh.pop %v934
        %937 = vrot.lane.b32.xlu0 %v935, 64
        %v938 = vpop.permute.xlu0 %937
        %v940 = vmul.f32 %v918, %v938
        %942 = vrot.lane.b32.xlu0 %v940, 32
        %v943 = vpop.permute.xlu0 %942
        %s945 = scalar_lea.vmem %s386, 24
        %946 = vst.msk [vmem:[%s945] sm:$0xff] %vm430, %v943
        %s947 = scalar_lea.vmem [#allocation2], 16
        %v948 = vld [vmem:[%s947] sm:$0xff]
        %v949 = vpack.c.bf16 %v940, %v940
        %951 = vrot.lane.b32.xlu0 %v949, 32
        %v952 = vpop.permute.xlu0 %951
        %v954 = vsel %vm430, %v952, 0
        %956 = vmatprep.subr.bf16.mxu0 0
        %957 = vmatpush1.bf16.msra.mxu0 0
        %958 = vmatprep.subr.bf16.mxu0 0
        %959 = vmatpush1.bf16.msra.mxu0 0
        %960 = vmatprep.subr.bf16.mxu0 0
        %961 = vmatpush1.bf16.msra.mxu0 0
        %962 = vmatprep.subr.bf16.mxu0 0
        %963 = vmatpush1.bf16.msra.mxu0 0
        %964 = vmatprep.subr.bf16.mxu0 0
        %965 = vmatpush1.bf16.msra.mxu0 0
        %966 = vmatprep.subr.bf16.mxu0 0
        %967 = vmatpush1.bf16.msra.mxu0 0
        %968 = vmatprep.subr.bf16.mxu0 0
        %969 = vmatpush1.bf16.msra.mxu0 %v866
        %970 = vmatprep.subr.bf16.mxu0 0
        %971 = vmatpush1.bf16.msra.mxu0 %v865
        %972 = vmatprep.subr.bf16.mxu0 0
        %973 = vmatpush2.bf16.msra.mxu0 0
        %974 = vmatprep.subr.bf16.mxu0 0
        %975 = vmatpush2.bf16.msra.mxu0 0
        %976 = vmatprep.subr.bf16.mxu0 0
        %977 = vmatpush2.bf16.msra.mxu0 0
        %978 = vmatprep.subr.bf16.mxu0 0
        %979 = vmatpush2.bf16.msra.mxu0 0
        %980 = vmatprep.subr.bf16.mxu0 0
        %981 = vmatpush2.bf16.msra.mxu0 0
        %982 = vmatprep.subr.bf16.mxu0 0
        %983 = vmatpush2.bf16.msra.mxu0 0
        %984 = vmatprep.subr.bf16.mxu0 0
        %985 = vmatpush2.bf16.msra.mxu0 0
        %986 = vmatprep.subr.bf16.mxu0 0
        %987 = vmatpush2.bf16.msra.mxu0 0
        %988 = vmatprep.mubr.bf16.mxu0 0
        %989 = vmatmul.mubr.bf16.gmra.mxu0 %v954
        %v990 = vpop.f32.mrf.mxu0
        %v991 = vadd.f32 0.0, %v990
        %v992 = vpop.f32.mrf.mxu0
        %v993 = vpop.f32.mrf.mxu0
        %v994 = vpop.f32.mrf.mxu0
        %995 = vdwg.mxu0
        %v996 = vadd.f32 %v948, %v991
        %v997 = vxor.u32 %v996, 2147483648
        %v998 = vmul.f32 %v997, 1.442695
        %v999 = vpow.pop %v998
        %v1000 = vadd.f32 %v999, 1.0
        %v1001 = vrcp.pop %v1000
        %v1002 = vmul.f32 1.0, %v1001
        %v1003 = vtanh.pop %v996
        %v1004 = vmul.f32 %v1002, %v934
        %1006 = vrot.lane.b32.xlu0 %v1003, 64
        %v1007 = vpop.permute.xlu0 %1006
        %v1009 = vmul.f32 %v1002, %v1007
        %1011 = vrot.lane.b32.xlu0 %v1009, 32
        %v1012 = vpop.permute.xlu0 %1011
        %v1014 = vadd.f32 %v1004, %v1012
        %v1015 = vtanh.pop %v1014
        %1017 = vrot.lane.b32.xlu0 %v1015, 64
        %v1018 = vpop.permute.xlu0 %1017
        %v1020 = vmul.f32 %v1002, %v1018
        %1022 = vrot.lane.b32.xlu0 %v1020, 32
        %v1023 = vpop.permute.xlu0 %1022
        %s1025 = scalar_lea.vmem %s386, 16
        %1026 = vst.msk [vmem:[%s1025] sm:$0xff] %vm430, %v1023
        %s1027 = scalar_lea.vmem [#allocation2], 8
        %v1028 = vld [vmem:[%s1027] sm:$0xff]
        %v1029 = vpack.c.bf16 %v1020, %v1020
        %1031 = vrot.lane.b32.xlu0 %v1029, 32
        %v1032 = vpop.permute.xlu0 %1031
        %v1034 = vsel %vm430, %v1032, 0
        %1036 = vmatprep.subr.bf16.mxu0 0
        %1037 = vmatpush1.bf16.msra.mxu0 0
        %1038 = vmatprep.subr.bf16.mxu0 0
        %1039 = vmatpush1.bf16.msra.mxu0 0
        %1040 = vmatprep.subr.bf16.mxu0 0
        %1041 = vmatpush1.bf16.msra.mxu0 0
        %1042 = vmatprep.subr.bf16.mxu0 0
        %1043 = vmatpush1.bf16.msra.mxu0 0
        %1044 = vmatprep.subr.bf16.mxu0 0
        %1045 = vmatpush1.bf16.msra.mxu0 0
        %1046 = vmatprep.subr.bf16.mxu0 0
        %1047 = vmatpush1.bf16.msra.mxu0 0
        %1048 = vmatprep.subr.bf16.mxu0 0
        %1049 = vmatpush1.bf16.msra.mxu0 %v866
        %1050 = vmatprep.subr.bf16.mxu0 0
        %1051 = vmatpush1.bf16.msra.mxu0 %v865
        %1052 = vmatprep.subr.bf16.mxu0 0
        %1053 = vmatpush2.bf16.msra.mxu0 0
        %1054 = vmatprep.subr.bf16.mxu0 0
        %1055 = vmatpush2.bf16.msra.mxu0 0
        %1056 = vmatprep.subr.bf16.mxu0 0
        %1057 = vmatpush2.bf16.msra.mxu0 0
        %1058 = vmatprep.subr.bf16.mxu0 0
        %1059 = vmatpush2.bf16.msra.mxu0 0
        %1060 = vmatprep.subr.bf16.mxu0 0
        %1061 = vmatpush2.bf16.msra.mxu0 0
        %1062 = vmatprep.subr.bf16.mxu0 0
        %1063 = vmatpush2.bf16.msra.mxu0 0
        %1064 = vmatprep.subr.bf16.mxu0 0
        %1065 = vmatpush2.bf16.msra.mxu0 0
        %1066 = vmatprep.subr.bf16.mxu0 0
        %1067 = vmatpush2.bf16.msra.mxu0 0
        %1068 = vmatprep.mubr.bf16.mxu0 0
        %1069 = vmatmul.mubr.bf16.gmra.mxu0 %v1034
        %v1070 = vpop.f32.mrf.mxu0
        %v1071 = vadd.f32 0.0, %v1070
        %v1072 = vpop.f32.mrf.mxu0
        %v1073 = vpop.f32.mrf.mxu0
        %v1074 = vpop.f32.mrf.mxu0
        %1075 = vdwg.mxu0
        %v1076 = vadd.f32 %v1028, %v1071
        %v1077 = vxor.u32 %v1076, 2147483648
        %v1078 = vmul.f32 %v1077, 1.442695
        %v1079 = vpow.pop %v1078
        %v1080 = vadd.f32 %v1079, 1.0
        %v1081 = vrcp.pop %v1080
        %v1082 = vmul.f32 1.0, %v1081
        %v1083 = vtanh.pop %v1076
        %v1084 = vmul.f32 %v1082, %v1014
        %1086 = vrot.lane.b32.xlu0 %v1083, 64
        %v1087 = vpop.permute.xlu0 %1086
        %v1089 = vmul.f32 %v1082, %v1087
        %1091 = vrot.lane.b32.xlu0 %v1089, 32
        %v1092 = vpop.permute.xlu0 %1091
        %v1094 = vadd.f32 %v1084, %v1092
        %v1095 = vtanh.pop %v1094
        %1097 = vrot.lane.b32.xlu0 %v1095, 64
        %v1098 = vpop.permute.xlu0 %1097
        %v1100 = vmul.f32 %v1082, %v1098
        %1102 = vrot.lane.b32.xlu0 %v1100, 32
        %v1103 = vpop.permute.xlu0 %1102
        %s1105 = scalar_lea.vmem %s386, 8
        %1106 = vst.msk [vmem:[%s1105] sm:$0xff] %vm430, %v1103
        %v1107 = vld [vmem:[#allocation2] sm:$0xff]
        %v1108 = vpack.c.bf16 %v1100, %v1100
        %1110 = vrot.lane.b32.xlu0 %v1108, 32
        %v1111 = vpop.permute.xlu0 %1110
        %v1113 = vsel %vm430, %v1111, 0
        %1115 = vmatprep.subr.bf16.mxu0 0
        %1116 = vmatpush1.bf16.msra.mxu0 0
        %1117 = vmatprep.subr.bf16.mxu0 0
        %1118 = vmatpush1.bf16.msra.mxu0 0
        %1119 = vmatprep.subr.bf16.mxu0 0
        %1120 = vmatpush1.bf16.msra.mxu0 0
        %1121 = vmatprep.subr.bf16.mxu0 0
        %1122 = vmatpush1.bf16.msra.mxu0 0
        %1123 = vmatprep.subr.bf16.mxu0 0
        %1124 = vmatpush1.bf16.msra.mxu0 0
        %1125 = vmatprep.subr.bf16.mxu0 0
        %1126 = vmatpush1.bf16.msra.mxu0 0
        %1127 = vmatprep.subr.bf16.mxu0 0
        %1128 = vmatpush1.bf16.msra.mxu0 %v866
        %1129 = vmatprep.subr.bf16.mxu0 0
        %1130 = vmatpush1.bf16.msra.mxu0 %v865
        %1131 = vmatprep.subr.bf16.mxu0 0
        %1132 = vmatpush2.bf16.msra.mxu0 0
        %1133 = vmatprep.subr.bf16.mxu0 0
        %1134 = vmatpush2.bf16.msra.mxu0 0
        %1135 = vmatprep.subr.bf16.mxu0 0
        %1136 = vmatpush2.bf16.msra.mxu0 0
        %1137 = vmatprep.subr.bf16.mxu0 0
        %1138 = vmatpush2.bf16.msra.mxu0 0
        %1139 = vmatprep.subr.bf16.mxu0 0
        %1140 = vmatpush2.bf16.msra.mxu0 0
        %1141 = vmatprep.subr.bf16.mxu0 0
        %1142 = vmatpush2.bf16.msra.mxu0 0
        %1143 = vmatprep.subr.bf16.mxu0 0
        %1144 = vmatpush2.bf16.msra.mxu0 0
        %1145 = vmatprep.subr.bf16.mxu0 0
        %1146 = vmatpush2.bf16.msra.mxu0 0
        %1147 = vmatprep.mubr.bf16.mxu0 0
        %1148 = vmatmul.mubr.bf16.gmra.mxu0 %v1113
        %v1149 = vpop.f32.mrf.mxu0
        %v1150 = vadd.f32 0.0, %v1149
        %v1151 = vpop.f32.mrf.mxu0
        %v1152 = vpop.f32.mrf.mxu0
        %v1153 = vpop.f32.mrf.mxu0
        %1154 = vdwg.mxu0
        %v1155 = vadd.f32 %v1107, %v1150
        %v1156 = vxor.u32 %v1155, 2147483648
        %v1157 = vmul.f32 %v1156, 1.442695
        %v1158 = vpow.pop %v1157
        %v1159 = vadd.f32 %v1158, 1.0
        %v1160 = vrcp.pop %v1159
        %v1161 = vmul.f32 1.0, %v1160
        %v1162 = vtanh.pop %v1155
        %v1163 = vmul.f32 %v1161, %v1094
        %1165 = vrot.lane.b32.xlu0 %v1162, 64
        %v1166 = vpop.permute.xlu0 %1165
        %v1168 = vmul.f32 %v1161, %v1166
        %1170 = vrot.lane.b32.xlu0 %v1168, 32
        %v1171 = vpop.permute.xlu0 %1170
        %v1173 = vadd.f32 %v1163, %v1171
        %v1174 = vtanh.pop %v1173
        %1176 = vrot.lane.b32.xlu0 %v1174, 64
        %v1177 = vpop.permute.xlu0 %1176
        %v1179 = vmul.f32 %v1161, %v1177
        %1181 = vrot.lane.b32.xlu0 %v1179, 32
        %v1182 = vpop.permute.xlu0 %1181
        %1184 = vst.msk [vmem:[%s386] sm:$0xff] %vm430, %v1182
        %1185 = vst.msk [vmem:[#allocation3] sm:$0xff] %vm430, %v1182
        %1187 = vrot.lane.b32.xlu0 %v1173, 96
        %v1188 = vpop.permute.xlu0 %1187
        %1190 = vst.msk [vmem:[#allocation4] sm:$0xff] %vm430, %v1188
      $region48: #{pblstm_layer_forward.1} parent=35 // pred_fallthru
        _
      %v1191 = vld [vmem:[#allocation3] sm:$0xff]
      %1192 = vst.msk [vmem:[%s395] sm:$0xff] %vm430, %v1191
      %v1193 = vld [vmem:[#allocation4] sm:$0xff]
      %1194 = vst.msk [vmem:[%s399] sm:$0xff] %vm430, %v1193
      %s1195 = smul.u32 %s23, 2
      %s1196 = ssub.s32 0, %s1195
      %s1197 = smul.u32 %s22, %s1196
      %s1198 = sadd.s32 %s23, %s1197
      %s1199 = smul.u32 4, %s1198
      %p1200 = scmp.lt.s32.totalorder %s22, 1
      %s1201 = scalar_select %p1200, %s22, 1
      %p1202 = scmp.lt.s32.totalorder %s1199, 3
      %s1203 = scalar_select %p1202, %s1199, 3
      %s1204 = smul.addr %s1201, 4
      %s1205 = sadd.s32 %s1203, %s1204
      %s1206 = smul.addr %s1205, 8
      %s1207 = scalar_lea.vmem %s4, %s1206
      %p1208 = scmp.lt.s32.totalorder %s22, 1
      %s1209 = scalar_select %p1208, %s22, 1
      %s1210 = smul.addr %s1209, 8
      %s1211 = scalar_lea.vmem %s5, %s1210
      %p1212 = scmp.lt.s32.totalorder %s22, 1
      %s1213 = scalar_select %p1212, %s22, 1
      %s1214 = smul.addr %s1213, 8
      %s1215 = scalar_lea.vmem %s6, %s1214
      // Predicated region
      $region49: #{pblstm_layer_forward.1} parent=35 // pred_check
        %p1216 = pneg %p170
      $region50: #{pblstm_layer_forward.1} parent=35 // pred_check_branch
        %1218 = sbr.rel (%p1216) target = $region52
      $region51: #{pblstm_layer_forward.1} parent=35 // pred_region
        %s1219 = smul.u32 %s23, 2
        %s1220 = ssub.s32 0, %s1219
        %s1221 = smul.u32 %s22, %s1220
        %s1222 = sadd.s32 %s23, %s1221
        %s1223 = smul.u32 4, %s1222
      $region52: #{pblstm_layer_forward.1} parent=35 // pred_fallthru
        _
      // Predicated region
      $region53: #{pblstm_layer_forward.1} parent=35 // pred_check
        %p1224 = pneg %p196
      $region54: #{pblstm_layer_forward.1} parent=35 // pred_check_branch
        %1226 = sbr.rel (%p1224) target = $region56
      $region55: #{pblstm_layer_forward.1} parent=35 // pred_region
        _
      $region56: #{pblstm_layer_forward.1} parent=35 // pred_fallthru
        _
      // Predicated region
      $region57: #{pblstm_layer_forward.1} parent=35 // pred_check
        %p1227 = pneg %p222
      $region58: #{pblstm_layer_forward.1} parent=35 // pred_check_branch
        %1229 = sbr.rel (%p1227) target = $region60
      $region59: #{pblstm_layer_forward.1} parent=35 // pred_region
        _
      $region60: #{pblstm_layer_forward.1} parent=35 // pred_fallthru
        _
    $region36: #{pblstm_layer_forward.1} parent=5 // pred_fallthru
      _
    %p1230 = scmp.le.s32.totalorder 2, %s13
    // Predicated region
    $region61: #{pblstm_layer_forward.1} parent=5 // pred_check
      %p1231 = pneg %p1230
    $region62: #{pblstm_layer_forward.1} parent=5 // pred_check_branch
      %1233 = sbr.rel (%p1231) target = $region64
    $region63: #{pblstm_layer_forward.1} parent=5 // pred_region
      %s1234 = ssub.s32 %s13, 2
      // Predicated region
      $region65: #{pblstm_layer_forward.1} parent=63 // pred_check
        %p1235 = pneg %p176
      $region66: #{pblstm_layer_forward.1} parent=63 // pred_check_branch
        %1237 = sbr.rel (%p1235) target = $region68
      $region67: #{pblstm_layer_forward.1} parent=63 // pred_region
        %s1238 = smul.u32 %s25, 2
        %s1239 = ssub.s32 0, %s1238
        %s1240 = smul.u32 %s24, %s1239
        %s1241 = sadd.s32 %s25, %s1240
        %s1242 = smul.u32 4, %s1241
        %p1243 = scmp.lt.s32.totalorder %s24, 1
        %s1244 = scalar_select %p1243, %s24, 1
        %p1245 = scmp.lt.s32.totalorder %s1242, 3
        %s1246 = scalar_select %p1245, %s1242, 3
        %s1247 = smul.addr %s1244, 4
        %s1248 = sadd.s32 %s1246, %s1247
        %s1249 = smul.addr %s1248, 8
        %s1250 = scalar_lea.vmem %s4, %s1249
      $region68: #{pblstm_layer_forward.1} parent=63 // pred_fallthru
        _
      // Predicated region
      $region69: #{pblstm_layer_forward.1} parent=63 // pred_check
        %p1251 = pneg %p202
      $region70: #{pblstm_layer_forward.1} parent=63 // pred_check_branch
        %1253 = sbr.rel (%p1251) target = $region72
      $region71: #{pblstm_layer_forward.1} parent=63 // pred_region
        %p1254 = scmp.lt.s32.totalorder %s24, 1
        %s1255 = scalar_select %p1254, %s24, 1
        %s1256 = smul.addr %s1255, 8
        %s1257 = scalar_lea.vmem %s5, %s1256
      $region72: #{pblstm_layer_forward.1} parent=63 // pred_fallthru
        _
      // Predicated region
      $region73: #{pblstm_layer_forward.1} parent=63 // pred_check
        %p1258 = pneg %p228
      $region74: #{pblstm_layer_forward.1} parent=63 // pred_check_branch
        %1260 = sbr.rel (%p1258) target = $region76
      $region75: #{pblstm_layer_forward.1} parent=63 // pred_region
        %p1261 = scmp.lt.s32.totalorder %s24, 1
        %s1262 = scalar_select %p1261, %s24, 1
        %s1263 = smul.addr %s1262, 8
        %s1264 = scalar_lea.vmem %s6, %s1263
      $region76: #{pblstm_layer_forward.1} parent=63 // pred_fallthru
        _
    $region64: #{pblstm_layer_forward.1} parent=5 // pred_fallthru
      _
  $region6: #{pblstm_layer_forward.1} parent=0 // loop_footer
    %s17 = sadd.s32 1, %s13
  $region7: #{pblstm_layer_forward.1} parent=0 // loop_footer_branch
    %12 = sbr.rel target = $region3
  $region8: #{pblstm_layer_forward.1} parent=0 // loop_exit
    _

</llo_original>
